<compile_context>
chip_gen: v7x
topology: tpu7x:2x2x1
jax: 0.10.0
libtpu: 0.0.40
codegen_flags: <defaults>
</compile_context>

<pallas_src>
import functools

import jax
import jax.numpy as jnp
from jax import lax
from jax.experimental import pallas as pl
from jax.experimental.pallas import tpu as pltpu


def _up_conv_kernel(xm_ref, xh0_ref, xh1_ref, w_ref, shift_ref, o_ref, slab_ref):
    """Grid = (batch, row_tile).

    xm_ref:    (1, TH, Wq, 2*Cin)      bf16  main padded-row block (rows [h*TH, h*TH+TH))
    xh0_ref:   (1, 1,  Wq, 2*Cin)      bf16  bottom halo row h*TH+TH
    xh1_ref:   (1, 1,  Wq, 2*Cin)      bf16  bottom halo row h*TH+TH+1
    w_ref:     (2, 2, 2, 2*Cin, 4*Cout) bf16 folded weights [row parity a, row tap u, pair shift s]
    shift_ref: (1, 4*Cout)             f32   folded conv-bias + BN shift (tiled over 4 col classes)
    o_ref:     (1, TH, 2, W/2, 4*Cout) bf16  parity/group-packed output row tile
    slab_ref:  (TH+2, Wq, 2*Cin)       bf16  scratch: main + halo stitched contiguously
    """
    TH = xm_ref.shape[1]
    Wq = xm_ref.shape[2]          # W // 2 + 1 column pairs (incl. left/right zero pad)
    K2 = xm_ref.shape[3]          # 2 * Cin
    Wh = o_ref.shape[3]           # W // 2
    N4 = o_ref.shape[4]           # 4 * Cout

    # Stitch the TH main rows and the 2 halo rows into a contiguous slab so
    # every row window below is a free major-dim slice.
    slab_ref[0:TH, :, :] = xm_ref[0]
    slab_ref[TH, :, :] = xh0_ref[0, 0]
    slab_ref[TH + 1, :, :] = xh1_ref[0, 0]

    shift = shift_ref[0]          # (4*Cout,)

    # out[2i+a, 4p'+m, :] = sum_{u,s} xq[i+a+u, p'+s, :] @ W[a, u, s][:, m*Cout:(m+1)*Cout]
    for a in range(2):            # output row parity
        acc = None
        for u in range(2):        # row tap
            d = a + u             # row window offset into the slab (0, 1 or 2)
            q0 = slab_ref[d:d + TH, 0:Wh, :].reshape(TH * Wh, K2)       # pair p'
            q1 = slab_ref[d:d + TH, 1:Wh + 1, :].reshape(TH * Wh, K2)   # pair p'+1
            t = (jnp.dot(q0, w_ref[a, u, 0], preferred_element_type=jnp.float32)
                 + jnp.dot(q1, w_ref[a, u, 1], preferred_element_type=jnp.float32))
            acc = t if acc is None else acc + t
        y = jnp.maximum(acc + shift, 0.0)                 # folded bias + BN, ReLU
        # Full-width (4*Cout) lane-dense store of one row parity.
        o_ref[0, :, a, :, :] = y.reshape(TH, Wh, N4).astype(o_ref.dtype)


def up_conv_forward(x_nchw, w_oihw, conv_bias, gamma, beta,
                    running_mean, running_var, eps=1e-5, tile_h=None,
                    out_dtype=jnp.bfloat16):
    """Forward pass of `up_conv`. Input is NCHW; output is NCHW (bf16 by default)."""
    N, Cin, H, W = x_nchw.shape
    Cout = w_oihw.shape[0]
    assert W % 2 == 0, "W must be even (column-pair packing)"
    Wh = W // 2
    Wq = Wh + 1                   # (W + 2) // 2 column pairs after 1px padding
    K2 = 2 * Cin
    N4 = 4 * Cout

    # ---- input prep (one fused XLA pass): NCHW->NHWC, bf16, 1px zero pad,
    #      pack adjacent column pairs into the channel/lane dim.
    x = jnp.transpose(x_nchw, (0, 2, 3, 1)).astype(jnp.bfloat16)      # (N,H,W,Cin)
    x = jnp.pad(x, ((0, 0), (1, 1), (1, 1), (0, 0)))                  # (N,H+2,W+2,Cin)
    xq = x.reshape(N, H + 2, Wq, K2)                                  # (N,H+2,Wq,2Cin)

    # ---- fold BN (inference) into per-channel scale/shift, scale into weights.
    scale = (gamma / jnp.sqrt(running_var + eps)).astype(jnp.float32)
    shift = (scale * (conv_bias - running_mean) + beta).astype(jnp.float32)
    w_hwio = jnp.transpose(w_oihw, (2, 3, 1, 0)).astype(jnp.float32) * scale  # (3,3,Cin,Cout)

    # ---- fold nearest-2x upsample into per-parity 2x2 taps:
    #   out[2i+a, 2j+b] = sum_{u,v} Wc[a,b,u,v] . xpad[i+a+u, j+b+v]
    A = jnp.array([[[1., 0., 0.], [0., 1., 1.]],                      # A[parity, tap, ky/kx]
                   [[1., 1., 0.], [0., 0., 1.]]], jnp.float32)
    wc = jnp.einsum('aud,bve,deio->abuvio', A, A, w_hwio)             # (2,2,2,2,Cin,Cout)

    # ---- repack taps for the paired-column layout:
    # wq[a, u, s][e*Cin+c, (2jp+b)*Cout+co] = sum over v with jp+b+v = 2s+e of wc[a,b,u,v,c,co]
    wq = jnp.zeros((2, 2, 2, K2, N4), jnp.float32)
    for a in range(2):
        for u in range(2):
            for b in range(2):
                for v in range(2):
                    for jp in range(2):
                        t = jp + b + v
                        s, e, m = t // 2, t % 2, 2 * jp + b
                        wq = wq.at[a, u, s,
                                   e * Cin:(e + 1) * Cin,
                                   m * Cout:(m + 1) * Cout].add(wc[a, b, u, v])
    wq = wq.astype(jnp.bfloat16)
    shift4 = jnp.tile(shift, 4).reshape(1, N4)                        # same shift for all 4 col classes

    # ---- generation-aware VMEM budget + explicit tile_h byte accounting.
    try:
        vmem_cap = int(pltpu.get_tpu_info().vmem_capacity_bytes)
    except Exception:  # pragma: no cover - conservative fallback
        vmem_cap = 64 * 1024 * 1024
    vmem_limit = max(32 * 1024 * 1024, min(vmem_cap * 3 // 4, 100 * 1024 * 1024))
    out_isize = jnp.dtype(out_dtype).itemsize

    if tile_h is None:
        budget = vmem_cap // 2
        fixed = (2 * (8 * K2 * N4 * 2)        # weight block (double buffered)
                 + 4 * (Wq * K2 * 2)          # two 1-row halo blocks (double buffered)
                 + 8 * N4 + 4096)             # shift + slack
        tile_h = 1
        for th in range(1, H + 1):
            if H % th:
                continue
            per_step = (2 * th * Wq * K2 * 2              # main input block x2
                        + 2 * th * 2 * Wh * N4 * out_isize   # output block x2
                        + (th + 2) * Wq * K2 * 2)         # slab scratch
            out_blk = th * 2 * Wh * N4 * out_isize
            if fixed + per_step <= budget and out_blk <= 8 * 1024 * 1024:
                tile_h = th
    assert tile_h >= 1 and H % tile_h == 0, "tile_h must divide H"
    n_h = H // tile_h
    th = tile_h  # captured by the index maps below (Python int)

    out6 = pl.pallas_call(
        _up_conv_kernel,
        out_shape=jax.ShapeDtypeStruct((N, H, 2, Wh, N4), out_dtype),
        grid_spec=pltpu.PrefetchScalarGridSpec(
            num_scalar_prefetch=0,
            grid=(N, n_h),
            in_specs=[
                pl.BlockSpec((1, th, Wq, K2), lambda n, h: (n, h, 0, 0)),
                pl.BlockSpec((1, 1, Wq, K2), lambda n, h: (n, (h + 1) * th, 0, 0)),
                pl.BlockSpec((1, 1, Wq, K2), lambda n, h: (n, (h + 1) * th + 1, 0, 0)),
                pl.BlockSpec((2, 2, 2, K2, N4), lambda n, h: (0, 0, 0, 0, 0)),
                pl.BlockSpec((1, N4), lambda n, h: (0, 0)),
            ],
            out_specs=pl.BlockSpec((1, th, 2, Wh, N4),
                                   lambda n, h: (n, h, 0, 0, 0)),
            scratch_shapes=[pltpu.VMEM((th + 2, Wq, K2), jnp.bfloat16)]),
        compiler_params=pltpu.CompilerParams(
            # no cross-iteration state -> both axes eligible for megacore sharding
            dimension_semantics=("parallel", "parallel"),
            vmem_limit_bytes=vmem_limit),
    )(xq, xq, xq, wq, shift4)

    # (N, H, 2, W/2, 4*Cout) -> NHWC (N, 2H, 2W, Cout): FREE row-major reshape.
    out_nhwc = out6.reshape(N, 2 * H, 2 * W, Cout)
    # TODO(synk): if the surrounding model is NHWC this transpose disappears.
    return jnp.transpose(out_nhwc, (0, 3, 1, 2))                      # NHWC -> NCHW


def _reference(x_nchw, w_oihw, conv_bias, gamma, beta,
               running_mean, running_var, eps=1e-5):
    """Pure-JAX f32 reference (correctness check only)."""
    x = jnp.transpose(x_nchw, (0, 2, 3, 1))
    x_up = jnp.repeat(jnp.repeat(x, 2, axis=1), 2, axis=2)
    w_hwio = jnp.transpose(w_oihw, (2, 3, 1, 0))
    y = lax.conv_general_dilated(
        x_up, w_hwio, window_strides=(1, 1), padding="SAME",
        dimension_numbers=("NHWC", "HWIO", "NHWC"))
    y = y + conv_bias
    y = gamma * (y - running_mean) / jnp.sqrt(running_var + eps) + beta
    y = jnp.maximum(y, 0.0)
    return jnp.transpose(y, (0, 3, 1, 2))


if __name__ == "__main__":
    key = jax.random.PRNGKey(0)
    k_x, k_w, k_b, k_g, k_bt, k_m, k_v = jax.random.split(key, 7)

    N, Cin, Cout, H, W = 2, 4, 8, 16, 16

    x = jax.random.normal(k_x, (N, Cin, H, W), dtype=jnp.float32)
    w = jax.random.normal(k_w, (Cout, Cin, 3, 3), dtype=jnp.float32) * 0.1
    conv_bias = jax.random.normal(k_b, (Cout,), dtype=jnp.float32) * 0.1
    gamma = 1.0 + 0.1 * jax.random.normal(k_g, (Cout,), dtype=jnp.float32)
    beta = 0.1 * jax.random.normal(k_bt, (Cout,), dtype=jnp.float32)
    running_mean = 0.1 * jax.random.normal(k_m, (Cout,), dtype=jnp.float32)
    running_var = jnp.abs(1.0 + 0.1 * jax.random.normal(k_v, (Cout,), dtype=jnp.float32))

    ref = _reference(x, w, conv_bias, gamma, beta, running_mean, running_var)

    # tile_h=8 -> 2 row tiles per image: exercises the bottom-halo stitch path.
    fwd = jax.jit(functools.partial(up_conv_forward, tile_h=8))
    out = jax.block_until_ready(
        fwd(x, w, conv_bias, gamma, beta, running_mean, running_var))
    assert out.shape == (N, Cout, 2 * H, 2 * W), out.shape
    # bf16 MXU inputs + bf16 output (f32 accumulation) -> loosened tolerance.
    diff = jnp.max(jnp.abs(out.astype(jnp.float32) - ref))
    assert jnp.allclose(out.astype(jnp.float32), ref, atol=4e-2, rtol=4e-2), (
        "mismatch vs reference (tiled), max abs diff = %s" % diff)

    # Auto tile_h path (single row tile at this size).
    fwd2 = jax.jit(up_conv_forward)
    out2 = jax.block_until_ready(
        fwd2(x, w, conv_bias, gamma, beta, running_mean, running_var))
    diff2 = jnp.max(jnp.abs(out2.astype(jnp.float32) - ref))
    assert jnp.allclose(out2.astype(jnp.float32), ref, atol=4e-2, rtol=4e-2), (
        "mismatch vs reference (auto tile), max abs diff = %s" % diff2)

    print("KERNEL_OK")
</pallas_src>

<mosaic_0001>
module attributes {stable_mosaic.version = 11 : i64} {
  func.func @_up_conv_kernel(%arg0: i32, %arg1: i32, %arg2: memref<1x8x9x8xbf16, #tpu.memory_space<vmem>>, %arg3: memref<1x1x9x8xbf16, #tpu.memory_space<vmem>>, %arg4: memref<1x1x9x8xbf16, #tpu.memory_space<vmem>>, %arg5: memref<2x2x2x8x32xbf16, #tpu.memory_space<vmem>>, %arg6: memref<1x32xf32, #tpu.memory_space<vmem>>, %arg7: memref<1x8x2x8x32xbf16, #tpu.memory_space<vmem>>, %arg8: memref<10x9x8xbf16, #tpu.memory_space<vmem>>) attributes {dimension_semantics = [#tpu.dimension_semantics<parallel>, #tpu.dimension_semantics<parallel>], iteration_bounds = array<i64: 2, 2>, scalar_prefetch = 0 : i64, scratch_operands = 1 : i64, tpu.core_type = #tpu.core_type<tc>, window_params = [{transform_indices = @transform_0, window_bounds = array<i64: 1, 8, 9, 8>}, {transform_indices = @transform_1, window_bounds = array<i64: 1, 1, 9, 8>}, {transform_indices = @transform_2, window_bounds = array<i64: 1, 1, 9, 8>}, {pipeline_mode = #tpu.pipeline_mode<synchronous>, transform_indices = @transform_3, window_bounds = array<i64: 2, 2, 2, 8, 32>}, {pipeline_mode = #tpu.pipeline_mode<synchronous>, transform_indices = @transform_4, window_bounds = array<i64: 1, 32>}, {transform_indices = @transform_5, window_bounds = array<i64: 1, 8, 2, 8, 32>}]} {
    %c0 = arith.constant 0 : index
    %c0_0 = arith.constant 0 : index
    %c0_1 = arith.constant 0 : index
    %c0_2 = arith.constant 0 : index
    %0 = vector.load %arg2[%c0, %c0_0, %c0_1, %c0_2] : memref<1x8x9x8xbf16, #tpu.memory_space<vmem>>, vector<1x8x9x8xbf16>
    %1 = vector.shape_cast %0 : vector<1x8x9x8xbf16> to vector<8x9x8xbf16>
    %c0_3 = arith.constant 0 : index
    %c0_4 = arith.constant 0 : index
    %c0_5 = arith.constant 0 : index
    %2 = vector.load %arg8[%c0_3, %c0_4, %c0_5] : memref<10x9x8xbf16, #tpu.memory_space<vmem>>, vector<8x9x8xbf16>
    tpu.vector_store %arg8[%c0_3, %c0_4, %c0_5], %1 {strides = array<i32>} : memref<10x9x8xbf16, #tpu.memory_space<vmem>>, vector<8x9x8xbf16>,
    %c0_6 = arith.constant 0 : index
    %c0_7 = arith.constant 0 : index
    %c0_8 = arith.constant 0 : index
    %c0_9 = arith.constant 0 : index
    %3 = vector.load %arg3[%c0_6, %c0_7, %c0_8, %c0_9] : memref<1x1x9x8xbf16, #tpu.memory_space<vmem>>, vector<1x1x9x8xbf16>
    %4 = vector.shape_cast %3 : vector<1x1x9x8xbf16> to vector<9x8xbf16>
    %c8 = arith.constant 8 : index
    %c0_10 = arith.constant 0 : index
    %c0_11 = arith.constant 0 : index
    %5 = vector.load %arg8[%c8, %c0_10, %c0_11] : memref<10x9x8xbf16, #tpu.memory_space<vmem>>, vector<1x9x8xbf16>
    %6 = vector.shape_cast %5 : vector<1x9x8xbf16> to vector<9x8xbf16>
    %7 = vector.shape_cast %4 : vector<9x8xbf16> to vector<1x9x8xbf16>
    tpu.vector_store %arg8[%c8, %c0_10, %c0_11], %7 {strides = array<i32>} : memref<10x9x8xbf16, #tpu.memory_space<vmem>>, vector<1x9x8xbf16>,
    %c0_12 = arith.constant 0 : index
    %c0_13 = arith.constant 0 : index
    %c0_14 = arith.constant 0 : index
    %c0_15 = arith.constant 0 : index
    %8 = vector.load %arg4[%c0_12, %c0_13, %c0_14, %c0_15] : memref<1x1x9x8xbf16, #tpu.memory_space<vmem>>, vector<1x1x9x8xbf16>
    %9 = vector.shape_cast %8 : vector<1x1x9x8xbf16> to vector<9x8xbf16>
    %c9 = arith.constant 9 : index
    %c0_16 = arith.constant 0 : index
    %c0_17 = arith.constant 0 : index
    %10 = vector.load %arg8[%c9, %c0_16, %c0_17] : memref<10x9x8xbf16, #tpu.memory_space<vmem>>, vector<1x9x8xbf16>
    %11 = vector.shape_cast %10 : vector<1x9x8xbf16> to vector<9x8xbf16>
    %12 = vector.shape_cast %9 : vector<9x8xbf16> to vector<1x9x8xbf16>
    tpu.vector_store %arg8[%c9, %c0_16, %c0_17], %12 {strides = array<i32>} : memref<10x9x8xbf16, #tpu.memory_space<vmem>>, vector<1x9x8xbf16>,
    %c0_18 = arith.constant 0 : index
    %c0_19 = arith.constant 0 : index
    %13 = vector.load %arg6[%c0_18, %c0_19] : memref<1x32xf32, #tpu.memory_space<vmem>>, vector<1x32xf32>
    %14 = vector.shape_cast %13 : vector<1x32xf32> to vector<32xf32>
    %c0_20 = arith.constant 0 : index
    %c0_21 = arith.constant 0 : index
    %c0_22 = arith.constant 0 : index
    %15 = vector.load %arg8[%c0_20, %c0_21, %c0_22] : memref<10x9x8xbf16, #tpu.memory_space<vmem>>, vector<8x8x8xbf16>
    %16 = vector.shape_cast %15 : vector<8x8x8xbf16> to vector<64x8xbf16>
    %c0_23 = arith.constant 0 : index
    %c1 = arith.constant 1 : index
    %c0_24 = arith.constant 0 : index
    %17 = vector.load %arg8[%c0_23, %c1, %c0_24] : memref<10x9x8xbf16, #tpu.memory_space<vmem>>, vector<8x8x8xbf16>
    %18 = vector.shape_cast %17 : vector<8x8x8xbf16> to vector<64x8xbf16>
    %c0_25 = arith.constant 0 : index
    %c0_26 = arith.constant 0 : index
    %c0_27 = arith.constant 0 : index
    %c0_28 = arith.constant 0 : index
    %c0_29 = arith.constant 0 : index
    %19 = vector.load %arg5[%c0_25, %c0_26, %c0_27, %c0_28, %c0_29] : memref<2x2x2x8x32xbf16, #tpu.memory_space<vmem>>, vector<1x1x1x8x32xbf16>
    %20 = vector.shape_cast %19 : vector<1x1x1x8x32xbf16> to vector<8x32xbf16>
    %cst = arith.constant dense<0.000000e+00> : vector<64x32xf32>
    %21 = tpu.matmul %16, %20, %cst {dimension_numbers = #tpu.dot_dimension_numbers<[1], [0], [0], [1], [0, 0, 1, 1], [], []>} : vector<64x8xbf16>, vector<8x32xbf16>, vector<64x32xf32> -> vector<64x32xf32>
    %c0_30 = arith.constant 0 : index
    %c0_31 = arith.constant 0 : index
    %c1_32 = arith.constant 1 : index
    %c0_33 = arith.constant 0 : index
    %c0_34 = arith.constant 0 : index
    %22 = vector.load %arg5[%c0_30, %c0_31, %c1_32, %c0_33, %c0_34] : memref<2x2x2x8x32xbf16, #tpu.memory_space<vmem>>, vector<1x1x1x8x32xbf16>
    %23 = vector.shape_cast %22 : vector<1x1x1x8x32xbf16> to vector<8x32xbf16>
    %cst_35 = arith.constant dense<0.000000e+00> : vector<64x32xf32>
    %24 = tpu.matmul %18, %23, %cst_35 {dimension_numbers = #tpu.dot_dimension_numbers<[1], [0], [0], [1], [0, 0, 1, 1], [], []>} : vector<64x8xbf16>, vector<8x32xbf16>, vector<64x32xf32> -> vector<64x32xf32>
    %25 = arith.addf %21, %24 : vector<64x32xf32>
    %c1_36 = arith.constant 1 : index
    %c0_37 = arith.constant 0 : index
    %c0_38 = arith.constant 0 : index
    %26 = vector.load %arg8[%c1_36, %c0_37, %c0_38] : memref<10x9x8xbf16, #tpu.memory_space<vmem>>, vector<8x8x8xbf16>
    %27 = vector.shape_cast %26 : vector<8x8x8xbf16> to vector<64x8xbf16>
    %c1_39 = arith.constant 1 : index
    %c1_40 = arith.constant 1 : index
    %c0_41 = arith.constant 0 : index
    %28 = vector.load %arg8[%c1_39, %c1_40, %c0_41] : memref<10x9x8xbf16, #tpu.memory_space<vmem>>, vector<8x8x8xbf16>
    %29 = vector.shape_cast %28 : vector<8x8x8xbf16> to vector<64x8xbf16>
    %c0_42 = arith.constant 0 : index
    %c1_43 = arith.constant 1 : index
    %c0_44 = arith.constant 0 : index
    %c0_45 = arith.constant 0 : index
    %c0_46 = arith.constant 0 : index
    %30 = vector.load %arg5[%c0_42, %c1_43, %c0_44, %c0_45, %c0_46] : memref<2x2x2x8x32xbf16, #tpu.memory_space<vmem>>, vector<1x1x1x8x32xbf16>
    %31 = vector.shape_cast %30 : vector<1x1x1x8x32xbf16> to vector<8x32xbf16>
    %cst_47 = arith.constant dense<0.000000e+00> : vector<64x32xf32>
    %32 = tpu.matmul %27, %31, %cst_47 {dimension_numbers = #tpu.dot_dimension_numbers<[1], [0], [0], [1], [0, 0, 1, 1], [], []>} : vector<64x8xbf16>, vector<8x32xbf16>, vector<64x32xf32> -> vector<64x32xf32>
    %c0_48 = arith.constant 0 : index
    %c1_49 = arith.constant 1 : index
    %c1_50 = arith.constant 1 : index
    %c0_51 = arith.constant 0 : index
    %c0_52 = arith.constant 0 : index
    %33 = vector.load %arg5[%c0_48, %c1_49, %c1_50, %c0_51, %c0_52] : memref<2x2x2x8x32xbf16, #tpu.memory_space<vmem>>, vector<1x1x1x8x32xbf16>
    %34 = vector.shape_cast %33 : vector<1x1x1x8x32xbf16> to vector<8x32xbf16>
    %cst_53 = arith.constant dense<0.000000e+00> : vector<64x32xf32>
    %35 = tpu.matmul %29, %34, %cst_53 {dimension_numbers = #tpu.dot_dimension_numbers<[1], [0], [0], [1], [0, 0, 1, 1], [], []>} : vector<64x8xbf16>, vector<8x32xbf16>, vector<64x32xf32> -> vector<64x32xf32>
    %36 = arith.addf %32, %35 : vector<64x32xf32>
    %37 = arith.addf %25, %36 : vector<64x32xf32>
    %38 = vector.shape_cast %14 : vector<32xf32> to vector<1x32xf32>
    %39 = vector.broadcast %38 : vector<1x32xf32> to vector<64x32xf32>
    %40 = arith.addf %37, %39 : vector<64x32xf32>
    %cst_54 = arith.constant 0.000000e+00 : f32
    %41 = vector.broadcast %cst_54 : f32 to vector<64x32xf32>
    %42 = arith.maximumf %40, %41 : vector<64x32xf32>
    %43 = vector.shape_cast %42 : vector<64x32xf32> to vector<8x8x32xf32>
    %44 = arith.truncf %43 : vector<8x8x32xf32> to vector<8x8x32xbf16>
    %c0_55 = arith.constant 0 : index
    %c0_56 = arith.constant 0 : index
    %c0_57 = arith.constant 0 : index
    %c0_58 = arith.constant 0 : index
    %c0_59 = arith.constant 0 : index
    %45 = vector.load %arg7[%c0_55, %c0_56, %c0_57, %c0_58, %c0_59] : memref<1x8x2x8x32xbf16, #tpu.memory_space<vmem>>, vector<1x8x1x8x32xbf16>
    %46 = vector.shape_cast %45 : vector<1x8x1x8x32xbf16> to vector<8x8x32xbf16>
    %47 = vector.shape_cast %44 : vector<8x8x32xbf16> to vector<1x8x1x8x32xbf16>
    tpu.vector_store %arg7[%c0_55, %c0_56, %c0_57, %c0_58, %c0_59], %47 {strides = array<i32>} : memref<1x8x2x8x32xbf16, #tpu.memory_space<vmem>>, vector<1x8x1x8x32xbf16>,
    %c1_60 = arith.constant 1 : index
    %c0_61 = arith.constant 0 : index
    %c0_62 = arith.constant 0 : index
    %48 = vector.load %arg8[%c1_60, %c0_61, %c0_62] : memref<10x9x8xbf16, #tpu.memory_space<vmem>>, vector<8x8x8xbf16>
    %49 = vector.shape_cast %48 : vector<8x8x8xbf16> to vector<64x8xbf16>
    %c1_63 = arith.constant 1 : index
    %c1_64 = arith.constant 1 : index
    %c0_65 = arith.constant 0 : index
    %50 = vector.load %arg8[%c1_63, %c1_64, %c0_65] : memref<10x9x8xbf16, #tpu.memory_space<vmem>>, vector<8x8x8xbf16>
    %51 = vector.shape_cast %50 : vector<8x8x8xbf16> to vector<64x8xbf16>
    %c1_66 = arith.constant 1 : index
    %c0_67 = arith.constant 0 : index
    %c0_68 = arith.constant 0 : index
    %c0_69 = arith.constant 0 : index
    %c0_70 = arith.constant 0 : index
    %52 = vector.load %arg5[%c1_66, %c0_67, %c0_68, %c0_69, %c0_70] : memref<2x2x2x8x32xbf16, #tpu.memory_space<vmem>>, vector<1x1x1x8x32xbf16>
    %53 = vector.shape_cast %52 : vector<1x1x1x8x32xbf16> to vector<8x32xbf16>
    %cst_71 = arith.constant dense<0.000000e+00> : vector<64x32xf32>
    %54 = tpu.matmul %49, %53, %cst_71 {dimension_numbers = #tpu.dot_dimension_numbers<[1], [0], [0], [1], [0, 0, 1, 1], [], []>} : vector<64x8xbf16>, vector<8x32xbf16>, vector<64x32xf32> -> vector<64x32xf32>
    %c1_72 = arith.constant 1 : index
    %c0_73 = arith.constant 0 : index
    %c1_74 = arith.constant 1 : index
    %c0_75 = arith.constant 0 : index
    %c0_76 = arith.constant 0 : index
    %55 = vector.load %arg5[%c1_72, %c0_73, %c1_74, %c0_75, %c0_76] : memref<2x2x2x8x32xbf16, #tpu.memory_space<vmem>>, vector<1x1x1x8x32xbf16>
    %56 = vector.shape_cast %55 : vector<1x1x1x8x32xbf16> to vector<8x32xbf16>
    %cst_77 = arith.constant dense<0.000000e+00> : vector<64x32xf32>
    %57 = tpu.matmul %51, %56, %cst_77 {dimension_numbers = #tpu.dot_dimension_numbers<[1], [0], [0], [1], [0, 0, 1, 1], [], []>} : vector<64x8xbf16>, vector<8x32xbf16>, vector<64x32xf32> -> vector<64x32xf32>
    %58 = arith.addf %54, %57 : vector<64x32xf32>
    %c2 = arith.constant 2 : index
    %c0_78 = arith.constant 0 : index
    %c0_79 = arith.constant 0 : index
    %59 = vector.load %arg8[%c2, %c0_78, %c0_79] : memref<10x9x8xbf16, #tpu.memory_space<vmem>>, vector<8x8x8xbf16>
    %60 = vector.shape_cast %59 : vector<8x8x8xbf16> to vector<64x8xbf16>
    %c2_80 = arith.constant 2 : index
    %c1_81 = arith.constant 1 : index
    %c0_82 = arith.constant 0 : index
    %61 = vector.load %arg8[%c2_80, %c1_81, %c0_82] : memref<10x9x8xbf16, #tpu.memory_space<vmem>>, vector<8x8x8xbf16>
    %62 = vector.shape_cast %61 : vector<8x8x8xbf16> to vector<64x8xbf16>
    %c1_83 = arith.constant 1 : index
    %c1_84 = arith.constant 1 : index
    %c0_85 = arith.constant 0 : index
    %c0_86 = arith.constant 0 : index
    %c0_87 = arith.constant 0 : index
    %63 = vector.load %arg5[%c1_83, %c1_84, %c0_85, %c0_86, %c0_87] : memref<2x2x2x8x32xbf16, #tpu.memory_space<vmem>>, vector<1x1x1x8x32xbf16>
    %64 = vector.shape_cast %63 : vector<1x1x1x8x32xbf16> to vector<8x32xbf16>
    %cst_88 = arith.constant dense<0.000000e+00> : vector<64x32xf32>
    %65 = tpu.matmul %60, %64, %cst_88 {dimension_numbers = #tpu.dot_dimension_numbers<[1], [0], [0], [1], [0, 0, 1, 1], [], []>} : vector<64x8xbf16>, vector<8x32xbf16>, vector<64x32xf32> -> vector<64x32xf32>
    %c1_89 = arith.constant 1 : index
    %c1_90 = arith.constant 1 : index
    %c1_91 = arith.constant 1 : index
    %c0_92 = arith.constant 0 : index
    %c0_93 = arith.constant 0 : index
    %66 = vector.load %arg5[%c1_89, %c1_90, %c1_91, %c0_92, %c0_93] : memref<2x2x2x8x32xbf16, #tpu.memory_space<vmem>>, vector<1x1x1x8x32xbf16>
    %67 = vector.shape_cast %66 : vector<1x1x1x8x32xbf16> to vector<8x32xbf16>
    %cst_94 = arith.constant dense<0.000000e+00> : vector<64x32xf32>
    %68 = tpu.matmul %62, %67, %cst_94 {dimension_numbers = #tpu.dot_dimension_numbers<[1], [0], [0], [1], [0, 0, 1, 1], [], []>} : vector<64x8xbf16>, vector<8x32xbf16>, vector<64x32xf32> -> vector<64x32xf32>
    %69 = arith.addf %65, %68 : vector<64x32xf32>
    %70 = arith.addf %58, %69 : vector<64x32xf32>
    %71 = vector.shape_cast %14 : vector<32xf32> to vector<1x32xf32>
    %72 = vector.broadcast %71 : vector<1x32xf32> to vector<64x32xf32>
    %73 = arith.addf %70, %72 : vector<64x32xf32>
    %cst_95 = arith.constant 0.000000e+00 : f32
    %74 = vector.broadcast %cst_95 : f32 to vector<64x32xf32>
    %75 = arith.maximumf %73, %74 : vector<64x32xf32>
    %76 = vector.shape_cast %75 : vector<64x32xf32> to vector<8x8x32xf32>
    %77 = arith.truncf %76 : vector<8x8x32xf32> to vector<8x8x32xbf16>
    %c0_96 = arith.constant 0 : index
    %c0_97 = arith.constant 0 : index
    %c1_98 = arith.constant 1 : index
    %c0_99 = arith.constant 0 : index
    %c0_100 = arith.constant 0 : index
    %78 = vector.load %arg7[%c0_96, %c0_97, %c1_98, %c0_99, %c0_100] : memref<1x8x2x8x32xbf16, #tpu.memory_space<vmem>>, vector<1x8x1x8x32xbf16>
    %79 = vector.shape_cast %78 : vector<1x8x1x8x32xbf16> to vector<8x8x32xbf16>
    %80 = vector.shape_cast %77 : vector<8x8x32xbf16> to vector<1x8x1x8x32xbf16>
    tpu.vector_store %arg7[%c0_96, %c0_97, %c1_98, %c0_99, %c0_100], %80 {strides = array<i32>} : memref<1x8x2x8x32xbf16, #tpu.memory_space<vmem>>, vector<1x8x1x8x32xbf16>,
    return
  }
  func.func @transform_0(%arg0: i32, %arg1: i32) -> (i32, i32, i32, i32) {
    %c0_i32 = arith.constant 0 : i32
    %c0_i32_0 = arith.constant 0 : i32
    %c0_i32_1 = arith.constant 0 : i32
    return %arg0, %arg1, %c0_i32, %c0_i32_0 : i32, i32, i32, i32
  }
  func.func @transform_1(%arg0: i32, %arg1: i32) -> (i32, i32, i32, i32) {
    %c1_i32 = arith.constant 1 : i32
    %0 = arith.addi %arg1, %c1_i32 : i32
    %c8_i32 = arith.constant 8 : i32
    %1 = arith.muli %0, %c8_i32 : i32
    %c0_i32 = arith.constant 0 : i32
    %c0_i32_0 = arith.constant 0 : i32
    %c0_i32_1 = arith.constant 0 : i32
    return %arg0, %1, %c0_i32, %c0_i32_0 : i32, i32, i32, i32
  }
  func.func @transform_2(%arg0: i32, %arg1: i32) -> (i32, i32, i32, i32) {
    %c1_i32 = arith.constant 1 : i32
    %0 = arith.addi %arg1, %c1_i32 : i32
    %c8_i32 = arith.constant 8 : i32
    %1 = arith.muli %0, %c8_i32 : i32
    %c1_i32_0 = arith.constant 1 : i32
    %2 = arith.addi %1, %c1_i32_0 : i32
    %c0_i32 = arith.constant 0 : i32
    %c0_i32_1 = arith.constant 0 : i32
    %c0_i32_2 = arith.constant 0 : i32
    return %arg0, %2, %c0_i32, %c0_i32_1 : i32, i32, i32, i32
  }
  func.func @transform_3(%arg0: i32, %arg1: i32) -> (i32, i32, i32, i32, i32) {
    %c0_i32 = arith.constant 0 : i32
    %c0_i32_0 = arith.constant 0 : i32
    %c0_i32_1 = arith.constant 0 : i32
    %c0_i32_2 = arith.constant 0 : i32
    %c0_i32_3 = arith.constant 0 : i32
    %c0_i32_4 = arith.constant 0 : i32
    return %c0_i32, %c0_i32_0, %c0_i32_1, %c0_i32_2, %c0_i32_3 : i32, i32, i32, i32, i32
  }
  func.func @transform_4(%arg0: i32, %arg1: i32) -> (i32, i32) {
    %c0_i32 = arith.constant 0 : i32
    %c0_i32_0 = arith.constant 0 : i32
    %c0_i32_1 = arith.constant 0 : i32
    return %c0_i32, %c0_i32_0 : i32, i32
  }
  func.func @transform_5(%arg0: i32, %arg1: i32) -> (i32, i32, i32, i32, i32) {
    %c0_i32 = arith.constant 0 : i32
    %c0_i32_0 = arith.constant 0 : i32
    %c0_i32_1 = arith.constant 0 : i32
    %c0_i32_2 = arith.constant 0 : i32
    return %arg0, %arg1, %c0_i32, %c0_i32_0, %c0_i32_1 : i32, i32, i32, i32, i32
  }
}

</mosaic_0001>

<llo_original>
// kernel: tile.8
$region0: #{tile.8}
  #allocation0 [shape = 's32[1]{0}', space=sflag, size = 0x4, scoped, tag = 'scoped memory for tile.8']
  %s0 = inlined_call_operand.vmem [shape: f32[8], index: 0, kind: input, shape index: {}]
  %s1 = inlined_call_operand.vmem [shape: f32[4,8], index: 1, kind: output, shape index: {}]
  // Predicated region
  $region2: #{tile.8} parent=0 // pred_check
    _
  $region3: #{tile.8} parent=0 // pred_check_branch
    %3 = sbr.rel (0) target = $region5
  $region4: #{tile.8} parent=0 // pred_region
    _
  $region5: #{tile.8} parent=0 // pred_fallthru
    _
  %v4 = vld [vmem:[%s0] ss:$0 sm:$0xff]
  %5 = vst [vmem:[%s1] sm:$0xf] %v4

// kernel: tile.9
$region0: #{tile.9}
  %s0 = inlined_call_operand.vmem [shape: f32[4,8], index: 0, kind: input, shape index: {}]
  %s1 = inlined_call_operand.vmem [shape: f32[1,32], index: 1, kind: output, shape index: {}]
  $region1: #{tile.9} parent=0
    #allocation0 [shape = 'u8[4096]{0}', space=vmem, size = 0x1000, scoped, tag = 'scoped mem for output reshape']
    #allocation1 [shape = 'u8[4096]{0}', space=vmem, size = 0x1000, scoped, tag = 'scoped mem for input reshape']
    %s3 = sshllo.u32 0, 4
    %v4 = vld [vmem:[%s0] sm:%s3]
    %5 = vst [vmem:[#allocation1] sm:%s3] %v4
    %v6 = vld [vmem:[#allocation1] sm:$0x1]
    %vm7 = vcmask 64512
    %8 = vst.msk [vmem:[#allocation0] sm:$0x1] %vm7, %v6
    %s9 = scalar_lea.vmem [#allocation1], 3
    %v10 = vld [vmem:[%s9] sm:$0x1]
    %11 = vrot.lane.b32.xlu0 %v10, 24
    %v12 = vpop.permute.xlu0 %11
    %vm13 = vcmask 261312
    %14 = vst.msk [vmem:[#allocation0] sm:$0x1] %vm13, %v12
    %s15 = scalar_lea.vmem [#allocation1], 2
    %v16 = vld [vmem:[%s15] sm:$0x1]
    %17 = vrot.lane.b32.xlu0 %v16, 16
    %v18 = vpop.permute.xlu0 %17
    %vm19 = vcmask 195712
    %20 = vst.msk [vmem:[#allocation0] sm:$0x1] %vm19, %v18
    %s21 = scalar_lea.vmem [#allocation1], 1
    %v22 = vld [vmem:[%s21] sm:$0x1]
    %23 = vrot.lane.b32.xlu0 %v22, 8
    %v24 = vpop.permute.xlu0 %23
    %vm25 = vcmask 130112
    %26 = vst.msk [vmem:[#allocation0] sm:$0x1] %vm25, %v24
    %s28 = sshllo.u32 0, 1
    %v30 = vld [vmem:[#allocation0] sm:%s28]
    %s31 = sshllo.u32 0, 1
    %32 = vst [vmem:[%s1] sm:%s31] %v30

// kernel: up_conv_forward.1
$region0: #{up_conv_forward.1}
  #allocation0 [shape = 'u32[]', space=smem, size = 0x4, offset = 0x4, fixed_abs, tag = 'smem constant byte address 0x4 - core index']
  #allocation1 [shape = 'u32[144,128]{1,0:T(1,128)}', space=vmem, size = 0x12000, scoped, tag = 'internal scratch']
  #allocation2 [shape = 'bf16[10,9,8]{2,1,0:T(8,128)(2,1)}', space=vmem, size = 0xa000, scoped, tag = 'scratch operand']
  %s0 = inlined_call_operand.vmem [shape: bf16[2,18,9,8], index: 0, kind: input, shape index: {}, may-alias: {0,1,2}]
  %s1 = inlined_call_operand.vmem [shape: bf16[2,18,9,8], index: 1, kind: input, shape index: {}, may-alias: {0,1,2}]
  %s2 = inlined_call_operand.vmem [shape: bf16[2,18,9,8], index: 2, kind: input, shape index: {}, may-alias: {0,1,2}]
  %s3 = inlined_call_operand.vmem [shape: bf16[2,2,2,8,32], index: 3, kind: input, shape index: {}]
  %s4 = inlined_call_operand.vmem [shape: f32[1,32], index: 4, kind: input, shape index: {}]
  %s5 = inlined_call_operand.vmem [shape: bf16[2,16,2,8,32], index: 5, kind: output, shape index: {}]
  %s6 = sld [smem:[#allocation0]]
  $region53: #{up_conv_forward.1} parent=0
    _
  %s8 = ssub.s32 1, %s6
  %s9 = scalar_select 0, %s8, %s6
  loop: start=0, step=1, limit=6
  $region2: #{up_conv_forward.1} parent=0 // loop_pre_header
    _
  $region3: #{up_conv_forward.1} parent=0 // loop_header
    %s11 = sphi 0, %s15
    %p12 = scmp.ge.s32.totalorder %s11, 6
    %s18 = sphi 0, %s30
    %s19 = sphi 0, %s26
    %s20 = sphi 0, %s18
    %s21 = sphi 0, %s19
    %s22 = sphi 0, %s20
    %s23 = sphi 0, %s21
    %s35 = sphi 0, %s37
    %s38 = sphi 0, %s35
    %s39 = sphi 0, %s38
    %s55 = sphi 0, %s39
    %s67 = sphi 0, %s69
    %s70 = sphi 0, %s67
    %s71 = sphi 0, %s70
    %s87 = sphi 0, %s71
    %s101 = sphi 0, %s103
    %s104 = sphi 0, %s101
    %s105 = sphi 0, %s104
    %s121 = sphi 0, %s105
    %s125 = sphi 0, %s125
    %s127 = sphi 0, %s125
    %s128 = sphi 0, %s127
    %s142 = sphi 0, %s128
    %s146 = sphi 0, %s146
    %s148 = sphi 0, %s146
    %s149 = sphi 0, %s148
    %s163 = sphi 0, %s149
    %s171 = sphi 0, %s173
    %s174 = sphi 0, %s171
    %s175 = sphi 0, %s174
    %s191 = sphi 0, %s175
  $region4: #{up_conv_forward.1} parent=0 // loop_header_branch
    %14 = sbr.rel (%p12) target = $region8
  $region5: #{up_conv_forward.1} parent=0 // loop_body
    %s16 = ssub.s32 %s11, 1
    %s17 = ssub.s32 %s11, 2
    %s24 = sadd.s32 1, %s19
    %p25 = scmp.ge.s32.totalorder %s24, 2
    %s26 = scalar_select %p25, 0, %s24
    %s27 = sadd.s32 1, %s18
    %s28 = scalar_select %p25, %s27, %s18
    %p29 = scmp.ge.s32.totalorder %s28, 2
    %s30 = scalar_select %p29, 0, %s28
    %s31 = ssub.s32 %s18, %s30
    %s32 = ssub.s32 %s19, %s26
    %s33 = sor.u32 %s31, %s32
    %p34 = scmp.eq.s32.totalorder %s33, 0
    %s36 = sadd.s32 %s35, 1
    %s37 = scalar_select %p34, %s35, %s36
    %p40 = pneg %p34
    %p41 = scmp.eq.s32.totalorder %s11, 3
    %p42 = por %p40, %p41
    %p43 = scmp.ne.s32.totalorder %s35, %s38
    %p44 = scmp.eq.s32.totalorder %s11, 0
    %p45 = por %p43, %p44
    %p46 = scmp.ne.s32.totalorder %s35, %s38
    %p47 = scmp.eq.s32.totalorder %s16, 3
    %p48 = por %p46, %p47
    %p49 = scmp.ne.s32.totalorder %s38, %s39
    %p50 = scmp.eq.s32.totalorder %s16, 0
    %p51 = por %p49, %p50
    %p52 = scmp.ne.s32.totalorder %s38, %s39
    %p53 = scmp.eq.s32.totalorder %s17, 3
    %p54 = por %p52, %p53
    %p56 = scmp.ne.s32.totalorder %s39, %s55
    %p57 = scmp.eq.s32.totalorder %s17, 0
    %p58 = por %p56, %p57
    %s59 = sadd.s32 %s19, 1
    %s60 = smul.u32 %s59, 8
    %s61 = sadd.s32 %s26, 1
    %s62 = smul.u32 %s61, 8
    %s63 = ssub.s32 %s18, %s30
    %s64 = ssub.s32 %s60, %s62
    %s65 = sor.u32 %s63, %s64
    %p66 = scmp.eq.s32.totalorder %s65, 0
    %s68 = sadd.s32 %s67, 1
    %s69 = scalar_select %p66, %s67, %s68
    %p72 = pneg %p66
    %p73 = scmp.eq.s32.totalorder %s11, 3
    %p74 = por %p72, %p73
    %p75 = scmp.ne.s32.totalorder %s67, %s70
    %p76 = scmp.eq.s32.totalorder %s11, 0
    %p77 = por %p75, %p76
    %p78 = scmp.ne.s32.totalorder %s67, %s70
    %p79 = scmp.eq.s32.totalorder %s16, 3
    %p80 = por %p78, %p79
    %p81 = scmp.ne.s32.totalorder %s70, %s71
    %p82 = scmp.eq.s32.totalorder %s16, 0
    %p83 = por %p81, %p82
    %p84 = scmp.ne.s32.totalorder %s70, %s71
    %p85 = scmp.eq.s32.totalorder %s17, 3
    %p86 = por %p84, %p85
    %p88 = scmp.ne.s32.totalorder %s71, %s87
    %p89 = scmp.eq.s32.totalorder %s17, 0
    %p90 = por %p88, %p89
    %s91 = sadd.s32 %s19, 1
    %s92 = smul.u32 %s91, 8
    %s93 = sadd.s32 %s92, 1
    %s94 = sadd.s32 %s26, 1
    %s95 = smul.u32 %s94, 8
    %s96 = sadd.s32 %s95, 1
    %s97 = ssub.s32 %s18, %s30
    %s98 = ssub.s32 %s93, %s96
    %s99 = sor.u32 %s97, %s98
    %p100 = scmp.eq.s32.totalorder %s99, 0
    %s102 = sadd.s32 %s101, 1
    %s103 = scalar_select %p100, %s101, %s102
    %p106 = pneg %p100
    %p107 = scmp.eq.s32.totalorder %s11, 3
    %p108 = por %p106, %p107
    %p109 = scmp.ne.s32.totalorder %s101, %s104
    %p110 = scmp.eq.s32.totalorder %s11, 0
    %p111 = por %p109, %p110
    %p112 = scmp.ne.s32.totalorder %s101, %s104
    %p113 = scmp.eq.s32.totalorder %s16, 3
    %p114 = por %p112, %p113
    %p115 = scmp.ne.s32.totalorder %s104, %s105
    %p116 = scmp.eq.s32.totalorder %s16, 0
    %p117 = por %p115, %p116
    %p118 = scmp.ne.s32.totalorder %s104, %s105
    %p119 = scmp.eq.s32.totalorder %s17, 3
    %p120 = por %p118, %p119
    %p122 = scmp.ne.s32.totalorder %s105, %s121
    %p123 = scmp.eq.s32.totalorder %s17, 0
    %p124 = por %p122, %p123
    %s126 = sadd.s32 %s125, 1
    %p129 = scmp.eq.s32.totalorder %s11, 3
    %p130 = scmp.ne.s32.totalorder %s125, %s127
    %p131 = scmp.eq.s32.totalorder %s11, 0
    %p132 = por %p130, %p131
    %p133 = scmp.ne.s32.totalorder %s125, %s127
    %p134 = scmp.eq.s32.totalorder %s16, 3
    %p135 = por %p133, %p134
    %p136 = scmp.ne.s32.totalorder %s127, %s128
    %p137 = scmp.eq.s32.totalorder %s16, 0
    %p138 = por %p136, %p137
    %p139 = scmp.ne.s32.totalorder %s127, %s128
    %p140 = scmp.eq.s32.totalorder %s17, 3
    %p141 = por %p139, %p140
    %p143 = scmp.ne.s32.totalorder %s128, %s142
    %p144 = scmp.eq.s32.totalorder %s17, 0
    %p145 = por %p143, %p144
    %s147 = sadd.s32 %s146, 1
    %p150 = scmp.eq.s32.totalorder %s11, 3
    %p151 = scmp.ne.s32.totalorder %s146, %s148
    %p152 = scmp.eq.s32.totalorder %s11, 0
    %p153 = por %p151, %p152
    %p154 = scmp.ne.s32.totalorder %s146, %s148
    %p155 = scmp.eq.s32.totalorder %s16, 3
    %p156 = por %p154, %p155
    %p157 = scmp.ne.s32.totalorder %s148, %s149
    %p158 = scmp.eq.s32.totalorder %s16, 0
    %p159 = por %p157, %p158
    %p160 = scmp.ne.s32.totalorder %s148, %s149
    %p161 = scmp.eq.s32.totalorder %s17, 3
    %p162 = por %p160, %p161
    %p164 = scmp.ne.s32.totalorder %s149, %s163
    %p165 = scmp.eq.s32.totalorder %s17, 0
    %p166 = por %p164, %p165
    %s167 = ssub.s32 %s18, %s30
    %s168 = ssub.s32 %s19, %s26
    %s169 = sor.u32 %s167, %s168
    %p170 = scmp.eq.s32.totalorder %s169, 0
    %s172 = sadd.s32 %s171, 1
    %s173 = scalar_select %p170, %s171, %s172
    %p176 = pneg %p170
    %p177 = scmp.eq.s32.totalorder %s11, 3
    %p178 = por %p176, %p177
    %p179 = scmp.ne.s32.totalorder %s171, %s174
    %p180 = scmp.eq.s32.totalorder %s11, 0
    %p181 = por %p179, %p180
    %p182 = scmp.ne.s32.totalorder %s171, %s174
    %p183 = scmp.eq.s32.totalorder %s16, 3
    %p184 = por %p182, %p183
    %p185 = scmp.ne.s32.totalorder %s174, %s175
    %p186 = scmp.eq.s32.totalorder %s16, 0
    %p187 = por %p185, %p186
    %p188 = scmp.ne.s32.totalorder %s174, %s175
    %p189 = scmp.eq.s32.totalorder %s17, 3
    %p190 = por %p188, %p189
    %p192 = scmp.ne.s32.totalorder %s175, %s191
    %p193 = scmp.eq.s32.totalorder %s17, 0
    %p194 = por %p192, %p193
    %p195 = scmp.le.s32.totalorder 1, %s11
    %p196 = scmp.lt.s32.totalorder %s11, 5
    %p197 = pnand %p195, %p196
    %p198 = pneg %p197
    // Predicated region
    $region9: #{up_conv_forward.1} parent=5 // pred_check
      _
    $region10: #{up_conv_forward.1} parent=5 // pred_check_branch
      %200 = sbr.rel (%p197) target = $region12
    $region11: #{up_conv_forward.1} parent=5 // pred_region
      %s201 = ssub.s32 %s11, 1
      // Predicated region
      $region13: #{up_conv_forward.1} parent=11 // pred_check
        %p202 = pneg %p138
      $region14: #{up_conv_forward.1} parent=11 // pred_check_branch
        %204 = sbr.rel (%p202) target = $region16
      $region15: #{up_conv_forward.1} parent=11 // pred_region
        _
      $region16: #{up_conv_forward.1} parent=11 // pred_fallthru
        _
      // Predicated region
      $region17: #{up_conv_forward.1} parent=11 // pred_check
        %p205 = pneg %p159
      $region18: #{up_conv_forward.1} parent=11 // pred_check_branch
        %207 = sbr.rel (%p205) target = $region20
      $region19: #{up_conv_forward.1} parent=11 // pred_region
        _
      $region20: #{up_conv_forward.1} parent=11 // pred_fallthru
        _
    $region12: #{up_conv_forward.1} parent=5 // pred_fallthru
      _
    %p208 = scmp.lt.s32.totalorder %s11, 4
    // Predicated region
    $region21: #{up_conv_forward.1} parent=5 // pred_check
      %p209 = pneg %p208
    $region22: #{up_conv_forward.1} parent=5 // pred_check_branch
      %211 = sbr.rel (%p209) target = $region24
    $region23: #{up_conv_forward.1} parent=5 // pred_region
      // Predicated region
      $region25: #{up_conv_forward.1} parent=23 // pred_check
        %p212 = pneg %p45
      $region26: #{up_conv_forward.1} parent=23 // pred_check_branch
        %214 = sbr.rel (%p212) target = $region28
      $region27: #{up_conv_forward.1} parent=23 // pred_region
        %s215 = smul.u32 8, %s19
        %s216 = ssub.s32 18, %s215
        %p217 = scmp.lt.s32.totalorder %s216, 8
        %s218 = scalar_select %p217, %s216, 8
        %s219 = smul.u32 64, %s218
        %s220 = smul.u32 %s219, 2
        %p221 = scmp.lt.s32.totalorder %s18, 1
        %s222 = scalar_select %p221, %s18, 1
        %p223 = scmp.lt.s32.totalorder %s215, 17
        %s224 = scalar_select %p223, %s215, 17
        %s225 = smul.addr %s224, 2
        %s226 = smul.addr %s222, 36
        %s227 = sadd.s32 %s225, %s226
        %s228 = smul.addr %s227, 4
        %s229 = scalar_lea.vmem %s0, %s228
        %s230 = smul.u32 8, %s19
        %s231 = ssub.s32 18, %s230
        %p232 = scmp.lt.s32.totalorder %s231, 8
        %s233 = scalar_select %p232, %s231, 8
        %s234 = smul.u32 64, %s233
        %s235 = smul.u32 %s234, 2
      $region28: #{up_conv_forward.1} parent=23 // pred_fallthru
        _
      // Predicated region
      $region29: #{up_conv_forward.1} parent=23 // pred_check
        %p236 = pneg %p77
      $region30: #{up_conv_forward.1} parent=23 // pred_check_branch
        %238 = sbr.rel (%p236) target = $region32
      $region31: #{up_conv_forward.1} parent=23 // pred_region
        %s239 = sadd.s32 %s19, 1
        %s240 = smul.u32 %s239, 8
        %p241 = scmp.lt.s32.totalorder %s18, 1
        %s242 = scalar_select %p241, %s18, 1
        %p243 = scmp.lt.s32.totalorder %s240, 17
        %s244 = scalar_select %p243, %s240, 17
        %s245 = smul.addr %s244, 2
        %s246 = smul.addr %s242, 36
        %s247 = sadd.s32 %s245, %s246
        %s248 = smul.addr %s247, 4
        %s249 = scalar_lea.vmem %s1, %s248
        %s250 = sadd.s32 %s19, 1
        %s251 = smul.u32 %s250, 8
      $region32: #{up_conv_forward.1} parent=23 // pred_fallthru
        _
      // Predicated region
      $region33: #{up_conv_forward.1} parent=23 // pred_check
        %p252 = pneg %p111
      $region34: #{up_conv_forward.1} parent=23 // pred_check_branch
        %254 = sbr.rel (%p252) target = $region36
      $region35: #{up_conv_forward.1} parent=23 // pred_region
        %s255 = sadd.s32 %s19, 1
        %s256 = smul.u32 %s255, 8
        %s257 = sadd.s32 %s256, 1
        %p258 = scmp.lt.s32.totalorder %s18, 1
        %s259 = scalar_select %p258, %s18, 1
        %p260 = scmp.lt.s32.totalorder %s257, 17
        %s261 = scalar_select %p260, %s257, 17
        %s262 = smul.addr %s261, 2
        %s263 = smul.addr %s259, 36
        %s264 = sadd.s32 %s262, %s263
        %s265 = smul.addr %s264, 4
        %s266 = scalar_lea.vmem %s2, %s265
        %s267 = sadd.s32 %s19, 1
        %s268 = smul.u32 %s267, 8
        %s269 = sadd.s32 %s268, 1
      $region36: #{up_conv_forward.1} parent=23 // pred_fallthru
        _
    $region24: #{up_conv_forward.1} parent=5 // pred_fallthru
      _
    %p270 = scmp.le.s32.totalorder 1, %s11
    %p271 = scmp.lt.s32.totalorder %s11, 5
    %p272 = pnand %p270, %p271
    %p273 = pneg %p272
    // Predicated region
    $region37: #{up_conv_forward.1} parent=5 // pred_check
      _
    $region38: #{up_conv_forward.1} parent=5 // pred_check_branch
      %275 = sbr.rel (%p272) target = $region40
    $region39: #{up_conv_forward.1} parent=5 // pred_region
      %s276 = ssub.s32 %s11, 1
      %s277 = smul.u32 8, %s21
      %s278 = ssub.s32 18, %s277
      %p279 = scmp.lt.s32.totalorder %s278, 8
      %s280 = scalar_select %p279, %s278, 8
      %s281 = smul.u32 64, %s280
      %s282 = smul.u32 %s281, 2
      %p283 = scmp.lt.s32.totalorder %s20, 1
      %s284 = scalar_select %p283, %s20, 1
      %p285 = scmp.lt.s32.totalorder %s277, 17
      %s286 = scalar_select %p285, %s277, 17
      %s287 = smul.addr %s286, 2
      %s288 = smul.addr %s284, 36
      %s289 = sadd.s32 %s287, %s288
      %s290 = smul.addr %s289, 4
      %s291 = scalar_lea.vmem %s0, %s290
      %p292 = pneg %p51
      %p293 = pneg %p48
      %s294 = sadd.s32 %s21, 1
      %s295 = smul.u32 %s294, 8
      %p296 = scmp.lt.s32.totalorder %s20, 1
      %s297 = scalar_select %p296, %s20, 1
      %p298 = scmp.lt.s32.totalorder %s295, 17
      %s299 = scalar_select %p298, %s295, 17
      %s300 = smul.addr %s299, 2
      %s301 = smul.addr %s297, 36
      %s302 = sadd.s32 %s300, %s301
      %s303 = smul.addr %s302, 4
      %s304 = scalar_lea.vmem %s1, %s303
      %p305 = pneg %p83
      %p306 = pneg %p80
      %s307 = sadd.s32 %s21, 1
      %s308 = smul.u32 %s307, 8
      %s309 = sadd.s32 %s308, 1
      %p310 = scmp.lt.s32.totalorder %s20, 1
      %s311 = scalar_select %p310, %s20, 1
      %p312 = scmp.lt.s32.totalorder %s309, 17
      %s313 = scalar_select %p312, %s309, 17
      %s314 = smul.addr %s313, 2
      %s315 = smul.addr %s311, 36
      %s316 = sadd.s32 %s314, %s315
      %s317 = smul.addr %s316, 4
      %s318 = scalar_lea.vmem %s2, %s317
      %p319 = pneg %p117
      %p320 = pneg %p114
      %p321 = pneg %p138
      %p322 = pneg %p135
      %p323 = pneg %p159
      %p324 = pneg %p156
      %p325 = pneg %p187
      %p326 = pneg %p184
      %s327 = smul.u32 8, %s21
      %p328 = scmp.lt.s32.totalorder %s20, 1
      %s329 = scalar_select %p328, %s20, 1
      %p330 = scmp.lt.s32.totalorder %s327, 15
      %s331 = scalar_select %p330, %s327, 15
      %s332 = smul.addr %s331, 2
      %s333 = smul.addr %s329, 32
      %s334 = sadd.s32 %s332, %s333
      %s335 = smul.addr %s334, 4
      %s336 = scalar_lea.vmem %s5, %s335
      %s337 = smul.u32 8, %s21
      %s338 = ssub.s32 18, %s337
      %p339 = scmp.lt.s32.totalorder %s338, 8
      %s340 = scalar_select %p339, %s338, 8
      %s341 = smul.u32 64, %s340
      %s342 = smul.u32 %s341, 2
      %p343 = scmp.lt.s32.totalorder %s20, 1
      %s344 = scalar_select %p343, %s20, 1
      %p345 = scmp.lt.s32.totalorder %s337, 17
      %s346 = scalar_select %p345, %s337, 17
      %s347 = smul.addr %s346, 2
      %s348 = smul.addr %s344, 36
      %s349 = sadd.s32 %s347, %s348
      %s350 = smul.addr %s349, 4
      %s351 = scalar_lea.vmem %s0, %s350
      %s352 = smul.u32 8, %s21
      %s353 = ssub.s32 18, %s352
      %p354 = scmp.lt.s32.totalorder %s353, 8
      %s355 = scalar_select %p354, %s353, 8
      %s356 = smul.u32 64, %s355
      %s357 = smul.u32 %s356, 2
      %s358 = sadd.s32 %s21, 1
      %s359 = smul.u32 %s358, 8
      %p360 = scmp.lt.s32.totalorder %s20, 1
      %s361 = scalar_select %p360, %s20, 1
      %p362 = scmp.lt.s32.totalorder %s359, 17
      %s363 = scalar_select %p362, %s359, 17
      %s364 = smul.addr %s363, 2
      %s365 = smul.addr %s361, 36
      %s366 = sadd.s32 %s364, %s365
      %s367 = smul.addr %s366, 4
      %s368 = scalar_lea.vmem %s1, %s367
      %s369 = sadd.s32 %s21, 1
      %s370 = smul.u32 %s369, 8
      %s371 = sadd.s32 %s21, 1
      %s372 = smul.u32 %s371, 8
      %s373 = sadd.s32 %s372, 1
      %p374 = scmp.lt.s32.totalorder %s20, 1
      %s375 = scalar_select %p374, %s20, 1
      %p376 = scmp.lt.s32.totalorder %s373, 17
      %s377 = scalar_select %p376, %s373, 17
      %s378 = smul.addr %s377, 2
      %s379 = smul.addr %s375, 36
      %s380 = sadd.s32 %s378, %s379
      %s381 = smul.addr %s380, 4
      %s382 = scalar_lea.vmem %s2, %s381
      %s383 = sadd.s32 %s21, 1
      %s384 = smul.u32 %s383, 8
      %s385 = sadd.s32 %s384, 1
      %s386 = smul.u32 8, %s21
      %p387 = scmp.lt.s32.totalorder %s20, 1
      %s388 = scalar_select %p387, %s20, 1
      %p389 = scmp.lt.s32.totalorder %s386, 15
      %s390 = scalar_select %p389, %s386, 15
      %s391 = smul.addr %s390, 2
      %s392 = smul.addr %s388, 32
      %s393 = sadd.s32 %s391, %s392
      %s394 = smul.addr %s393, 4
      %s395 = scalar_lea.vmem %s5, %s394
      %s396 = smul.u32 8, %s21
      %v398 = vld [vmem:[%s351] sm:$0xf]
      %v399 = vld [vmem:[%s351 + $0x4] sm:$0x1]
      %v400 = vld [vmem:[%s351 + $0x8] sm:$0xf]
      %v401 = vld [vmem:[%s351 + $0xc] sm:$0x1]
      %v402 = vld [vmem:[%s351 + $0x10] sm:$0xf]
      %v403 = vld [vmem:[%s351 + $0x14] sm:$0x1]
      %v404 = vld [vmem:[%s351 + $0x18] sm:$0xf]
      %v405 = vld [vmem:[%s351 + $0x1c] sm:$0x1]
      %v406 = vld [vmem:[%s351 + $0x20] sm:$0xf]
      %v407 = vld [vmem:[%s351 + $0x24] sm:$0x1]
      %v408 = vld [vmem:[%s351 + $0x28] sm:$0xf]
      %v409 = vld [vmem:[%s351 + $0x2c] sm:$0x1]
      %v410 = vld [vmem:[%s351 + $0x30] sm:$0xf]
      %v411 = vld [vmem:[%s351 + $0x34] sm:$0x1]
      %v412 = vld [vmem:[%s351 + $0x38] sm:$0xf]
      %v413 = vld [vmem:[%s351 + $0x3c] sm:$0x1]
      %vm414 = vcmask 60416
      %415 = vst.msk [vmem:[#allocation2] sm:$0xf] %vm414, %v398
      %vm416 = vcmask 57344
      %vm417 = vsmask.f32 256
      %vm418 = vmand %vm416, %vm417
      %v419 = vld [vmem:[#allocation2 + $0x4] sm:$0x1]
      %v420 = vsel %vm418, %v399, %v419
      %421 = vst [vmem:[#allocation2 + $0x4] sm:$0x1] %v420
      %422 = vst.msk [vmem:[#allocation2 + $0x8] sm:$0xf] %vm414, %v400
      %v423 = vld [vmem:[#allocation2 + $0xc] sm:$0x1]
      %v424 = vsel %vm418, %v401, %v423
      %425 = vst [vmem:[#allocation2 + $0xc] sm:$0x1] %v424
      %426 = vst.msk [vmem:[#allocation2 + $0x10] sm:$0xf] %vm414, %v402
      %v427 = vld [vmem:[#allocation2 + $0x14] sm:$0x1]
      %v428 = vsel %vm418, %v403, %v427
      %429 = vst [vmem:[#allocation2 + $0x14] sm:$0x1] %v428
      %430 = vst.msk [vmem:[#allocation2 + $0x18] sm:$0xf] %vm414, %v404
      %v431 = vld [vmem:[#allocation2 + $0x1c] sm:$0x1]
      %v432 = vsel %vm418, %v405, %v431
      %433 = vst [vmem:[#allocation2 + $0x1c] sm:$0x1] %v432
      %434 = vst.msk [vmem:[#allocation2 + $0x20] sm:$0xf] %vm414, %v406
      %v435 = vld [vmem:[#allocation2 + $0x24] sm:$0x1]
      %v436 = vsel %vm418, %v407, %v435
      %437 = vst [vmem:[#allocation2 + $0x24] sm:$0x1] %v436
      %438 = vst.msk [vmem:[#allocation2 + $0x28] sm:$0xf] %vm414, %v408
      %v439 = vld [vmem:[#allocation2 + $0x2c] sm:$0x1]
      %v440 = vsel %vm418, %v409, %v439
      %441 = vst [vmem:[#allocation2 + $0x2c] sm:$0x1] %v440
      %442 = vst.msk [vmem:[#allocation2 + $0x30] sm:$0xf] %vm414, %v410
      %v443 = vld [vmem:[#allocation2 + $0x34] sm:$0x1]
      %v444 = vsel %vm418, %v411, %v443
      %445 = vst [vmem:[#allocation2 + $0x34] sm:$0x1] %v444
      %446 = vst.msk [vmem:[#allocation2 + $0x38] sm:$0xf] %vm414, %v412
      %v447 = vld [vmem:[#allocation2 + $0x3c] sm:$0x1]
      %v448 = vsel %vm418, %v413, %v447
      %449 = vst [vmem:[#allocation2 + $0x3c] sm:$0x1] %v448
      %v450 = vld [vmem:[%s368] sm:$0xf]
      %v451 = vld [vmem:[%s368 + $0x4] sm:$0x1]
      %s452 = scalar_lea.vmem [#allocation2], 64
      %453 = vst.msk [vmem:[%s452] sm:$0xf] %vm414, %v450
      %v454 = vld [vmem:[%s452 + $0x4] sm:$0x1]
      %v455 = vsel %vm418, %v451, %v454
      %456 = vst [vmem:[%s452 + $0x4] sm:$0x1] %v455
      %v457 = vld [vmem:[%s382] sm:$0xf]
      %v458 = vld [vmem:[%s382 + $0x4] sm:$0x1]
      %s459 = scalar_lea.vmem [#allocation2], 72
      %460 = vst.msk [vmem:[%s459] sm:$0xf] %vm414, %v457
      %v461 = vld [vmem:[%s459 + $0x4] sm:$0x1]
      %v462 = vsel %vm418, %v458, %v461
      %463 = vst [vmem:[%s459 + $0x4] sm:$0x1] %v462
      %v464 = vld [vmem:[%s4] sm:$0x1]
      %v465 = vld [vmem:[#allocation2] sm:$0xf]
      %v466 = vld [vmem:[#allocation2 + $0x8] sm:$0xf]
      %v467 = vld [vmem:[#allocation2 + $0x10] sm:$0xf]
      %v468 = vld [vmem:[#allocation2 + $0x18] sm:$0xf]
      %v469 = vld [vmem:[#allocation2 + $0x20] sm:$0xf]
      %v470 = vld [vmem:[#allocation2 + $0x28] sm:$0xf]
      %v471 = vld [vmem:[#allocation2 + $0x30] sm:$0xf]
      %v472 = vld [vmem:[#allocation2 + $0x38] sm:$0xf]
      %v473 = vld [vmem:[#allocation2 + $0x4] sm:$0x1]
      %v474 = vld [vmem:[#allocation2 + $0xc] sm:$0x1]
      %v475 = vld [vmem:[#allocation2 + $0x14] sm:$0x1]
      %v476 = vld [vmem:[#allocation2 + $0x1c] sm:$0x1]
      %v477 = vld [vmem:[#allocation2 + $0x24] sm:$0x1]
      %v478 = vld [vmem:[#allocation2 + $0x2c] sm:$0x1]
      %v479 = vld [vmem:[#allocation2 + $0x34] sm:$0x1]
      %v480 = vld [vmem:[#allocation2 + $0x3c] sm:$0x1]
      %vm481 = vsmask.f32 3328
      %vm482 = vsmask.f32 7440
      %vm483 = vmor %vm481, %vm482
      %v485 = vshrl.u32 %v465, 16
      %v487 = vrot.slane %v485, 4
      %v488 = vshll.u32 %v465, 16
      %v490 = vrot.slane %v488, 5
      %v491 = vor.u32 %v487, %v490
      %v492 = vrot.slane %v491, 4
      %v494 = vshll.u32 %v473, 16
      %v496 = vrot.slane %v494, 5
      %v497 = vsel %vm483, %v492, %v496
      %v499 = vshrl.u32 %v466, 16
      %v501 = vrot.slane %v499, 4
      %v502 = vshll.u32 %v466, 16
      %v504 = vrot.slane %v502, 5
      %v505 = vor.u32 %v501, %v504
      %v506 = vrot.slane %v505, 4
      %v508 = vshll.u32 %v474, 16
      %v510 = vrot.slane %v508, 5
      %v511 = vsel %vm483, %v506, %v510
      %v513 = vshrl.u32 %v467, 16
      %v515 = vrot.slane %v513, 4
      %v516 = vshll.u32 %v467, 16
      %v518 = vrot.slane %v516, 5
      %v519 = vor.u32 %v515, %v518
      %v520 = vrot.slane %v519, 4
      %v522 = vshll.u32 %v475, 16
      %v524 = vrot.slane %v522, 5
      %v525 = vsel %vm483, %v520, %v524
      %v527 = vshrl.u32 %v468, 16
      %v529 = vrot.slane %v527, 4
      %v530 = vshll.u32 %v468, 16
      %v532 = vrot.slane %v530, 5
      %v533 = vor.u32 %v529, %v532
      %v534 = vrot.slane %v533, 4
      %v536 = vshll.u32 %v476, 16
      %v538 = vrot.slane %v536, 5
      %v539 = vsel %vm483, %v534, %v538
      %v541 = vshrl.u32 %v469, 16
      %v543 = vrot.slane %v541, 4
      %v544 = vshll.u32 %v469, 16
      %v546 = vrot.slane %v544, 5
      %v547 = vor.u32 %v543, %v546
      %v548 = vrot.slane %v547, 4
      %v550 = vshll.u32 %v477, 16
      %v552 = vrot.slane %v550, 5
      %v553 = vsel %vm483, %v548, %v552
      %v555 = vshrl.u32 %v470, 16
      %v557 = vrot.slane %v555, 4
      %v558 = vshll.u32 %v470, 16
      %v560 = vrot.slane %v558, 5
      %v561 = vor.u32 %v557, %v560
      %v562 = vrot.slane %v561, 4
      %v564 = vshll.u32 %v478, 16
      %v566 = vrot.slane %v564, 5
      %v567 = vsel %vm483, %v562, %v566
      %v569 = vshrl.u32 %v471, 16
      %v571 = vrot.slane %v569, 4
      %v572 = vshll.u32 %v471, 16
      %v574 = vrot.slane %v572, 5
      %v575 = vor.u32 %v571, %v574
      %v576 = vrot.slane %v575, 4
      %v578 = vshll.u32 %v479, 16
      %v580 = vrot.slane %v578, 5
      %v581 = vsel %vm483, %v576, %v580
      %v583 = vshrl.u32 %v472, 16
      %v585 = vrot.slane %v583, 4
      %v586 = vshll.u32 %v472, 16
      %v588 = vrot.slane %v586, 5
      %v589 = vor.u32 %v585, %v588
      %v590 = vrot.slane %v589, 4
      %v592 = vshll.u32 %v480, 16
      %v594 = vrot.slane %v592, 5
      %v595 = vsel %vm483, %v590, %v594
      %v596 = vld [vmem:[%s3] sm:$0xf]
      %s597 = scalar_lea.vmem %s3, 4
      %v598 = vld [vmem:[%s597] sm:$0xf]
      %v599 = vunpack.c.l.b16 %v497
      %v600 = vunpack.c.l.b16 %v511
      %v601 = vunpack.c.l.b16 %v525
      %v602 = vunpack.c.l.b16 %v539
      %v603 = vunpack.c.l.b16 %v553
      %v604 = vunpack.c.l.b16 %v567
      %v605 = vunpack.c.l.b16 %v581
      %v606 = vunpack.c.l.b16 %v595
      %v607 = vpack.c.b16 %v600, %v599
      %v608 = vpack.c.b16 %v602, %v601
      %v609 = vpack.c.b16 %v604, %v603
      %v610 = vpack.c.b16 %v606, %v605
      %vm611 = vcmask 64512
      %v613 = vsel %vm611, %v607, 0
      %v616 = vsel %vm611, %v608, 0
      %v619 = vsel %vm611, %v609, 0
      %v622 = vsel %vm611, %v610, 0
      %vm624 = vcmask 1043456
      %v626 = vsel %vm624, %v598, 0
      %628 = vmatprep.subr.bf16.mxu0 0
      %629 = vmatpush1.bf16.msra.mxu0 %v626
      %630 = vmatprep.subr.bf16.mxu0 0
      %631 = vmatpush1.bf16.msra.mxu0 0
      %632 = vmatprep.subr.bf16.mxu0 0
      %633 = vmatpush1.bf16.msra.mxu0 0
      %634 = vmatprep.subr.bf16.mxu0 0
      %635 = vmatpush1.bf16.msra.mxu0 0
      %636 = vmatprep.subr.bf16.mxu0 0
      %637 = vmatpush1.bf16.msra.mxu0 0
      %638 = vmatprep.subr.bf16.mxu0 0
      %639 = vmatpush1.bf16.msra.mxu0 0
      %640 = vmatprep.subr.bf16.mxu0 0
      %641 = vmatpush1.bf16.msra.mxu0 0
      %642 = vmatprep.subr.bf16.mxu0 0
      %643 = vmatpush1.bf16.msra.mxu0 0
      %644 = vmatprep.subr.bf16.mxu0 0
      %645 = vmatpush1.bf16.msra.mxu0 0
      %646 = vmatprep.subr.bf16.mxu0 0
      %647 = vmatpush1.bf16.msra.mxu0 0
      %648 = vmatprep.subr.bf16.mxu0 0
      %649 = vmatpush1.bf16.msra.mxu0 0
      %650 = vmatprep.subr.bf16.mxu0 0
      %651 = vmatpush1.bf16.msra.mxu0 0
      %652 = vmatprep.subr.bf16.mxu0 0
      %653 = vmatpush1.bf16.msra.mxu0 0
      %654 = vmatprep.subr.bf16.mxu0 0
      %655 = vmatpush1.bf16.msra.mxu0 0
      %656 = vmatprep.subr.bf16.mxu0 0
      %657 = vmatpush1.bf16.msra.mxu0 0
      %658 = vmatprep.subr.bf16.mxu0 0
      %659 = vmatpush1.bf16.msra.mxu0 0
      %660 = vmatprep.mubr.bf16.mxu0 0
      %661 = vmatmul.mubr.bf16.gmra.mrb[0].mxu0 %v613
      %v662 = vpop.f32.mrb[0].mxu0
      %v663 = vadd.f32 0.0, %v662
      %v664 = vpop.f32.mrb[0].mxu0
      %v665 = vpop.f32.mrb[0].mxu0
      %v666 = vadd.f32 0.0, %v665
      %v667 = vpop.f32.mrb[0].mxu0
      %668 = vmatprep.mubr.bf16.mxu0 0
      %669 = vmatmul.mubr.bf16.gmra.mrb[0].mxu0 %v616
      %v670 = vpop.f32.mrb[0].mxu0
      %v671 = vadd.f32 0.0, %v670
      %v672 = vpop.f32.mrb[0].mxu0
      %v673 = vpop.f32.mrb[0].mxu0
      %v674 = vadd.f32 0.0, %v673
      %v675 = vpop.f32.mrb[0].mxu0
      %676 = vmatprep.mubr.bf16.mxu0 0
      %677 = vmatmul.mubr.bf16.gmra.mrb[0].mxu0 %v619
      %v678 = vpop.f32.mrb[0].mxu0
      %v679 = vadd.f32 0.0, %v678
      %v680 = vpop.f32.mrb[0].mxu0
      %v681 = vpop.f32.mrb[0].mxu0
      %v682 = vadd.f32 0.0, %v681
      %v683 = vpop.f32.mrb[0].mxu0
      %684 = vmatprep.mubr.bf16.mxu0 0
      %685 = vmatmul.mubr.bf16.gmra.mrb[0].mxu0 %v622
      %v686 = vpop.f32.mrb[0].mxu0
      %v687 = vadd.f32 0.0, %v686
      %v688 = vpop.f32.mrb[0].mxu0
      %v689 = vpop.f32.mrb[0].mxu0
      %v690 = vadd.f32 0.0, %v689
      %v691 = vpop.f32.mrb[0].mxu0
      %692 = vdwg.mxu0
      %v701 = vunpack.c.l.b16 %v465
      %v702 = vunpack.c.l.b16 %v466
      %v703 = vunpack.c.l.b16 %v467
      %v704 = vunpack.c.l.b16 %v468
      %v705 = vunpack.c.l.b16 %v469
      %v706 = vunpack.c.l.b16 %v470
      %v707 = vunpack.c.l.b16 %v471
      %v708 = vunpack.c.l.b16 %v472
      %v709 = vpack.c.b16 %v702, %v701
      %v710 = vpack.c.b16 %v704, %v703
      %v711 = vpack.c.b16 %v706, %v705
      %v712 = vpack.c.b16 %v708, %v707
      %v714 = vsel %vm611, %v709, 0
      %v717 = vsel %vm611, %v710, 0
      %v720 = vsel %vm611, %v711, 0
      %v723 = vsel %vm611, %v712, 0
      %v726 = vsel %vm624, %v596, 0
      %728 = vmatprep.subr.bf16.mxu0 0
      %729 = vmatpush1.bf16.msra.mxu0 %v726
      %730 = vmatprep.subr.bf16.mxu0 0
      %731 = vmatpush1.bf16.msra.mxu0 0
      %732 = vmatprep.subr.bf16.mxu0 0
      %733 = vmatpush1.bf16.msra.mxu0 0
      %734 = vmatprep.subr.bf16.mxu0 0
      %735 = vmatpush1.bf16.msra.mxu0 0
      %736 = vmatprep.subr.bf16.mxu0 0
      %737 = vmatpush1.bf16.msra.mxu0 0
      %738 = vmatprep.subr.bf16.mxu0 0
      %739 = vmatpush1.bf16.msra.mxu0 0
      %740 = vmatprep.subr.bf16.mxu0 0
      %741 = vmatpush1.bf16.msra.mxu0 0
      %742 = vmatprep.subr.bf16.mxu0 0
      %743 = vmatpush1.bf16.msra.mxu0 0
      %744 = vmatprep.subr.bf16.mxu0 0
      %745 = vmatpush1.bf16.msra.mxu0 0
      %746 = vmatprep.subr.bf16.mxu0 0
      %747 = vmatpush1.bf16.msra.mxu0 0
      %748 = vmatprep.subr.bf16.mxu0 0
      %749 = vmatpush1.bf16.msra.mxu0 0
      %750 = vmatprep.subr.bf16.mxu0 0
      %751 = vmatpush1.bf16.msra.mxu0 0
      %752 = vmatprep.subr.bf16.mxu0 0
      %753 = vmatpush1.bf16.msra.mxu0 0
      %754 = vmatprep.subr.bf16.mxu0 0
      %755 = vmatpush1.bf16.msra.mxu0 0
      %756 = vmatprep.subr.bf16.mxu0 0
      %757 = vmatpush1.bf16.msra.mxu0 0
      %758 = vmatprep.subr.bf16.mxu0 0
      %759 = vmatpush1.bf16.msra.mxu0 0
      %760 = vmatprep.mubr.bf16.mxu0 0
      %761 = vmatmul.mubr.bf16.gmra.mrb[0].mxu0 %v714
      %v762 = vpop.f32.mrb[0].mxu0
      %v763 = vadd.f32 %v663, %v762
      %v764 = vpop.f32.mrb[0].mxu0
      %v765 = vpop.f32.mrb[0].mxu0
      %v766 = vadd.f32 %v666, %v765
      %v767 = vpop.f32.mrb[0].mxu0
      %768 = vmatprep.mubr.bf16.mxu0 0
      %769 = vmatmul.mubr.bf16.gmra.mrb[0].mxu0 %v717
      %v770 = vpop.f32.mrb[0].mxu0
      %v771 = vadd.f32 %v671, %v770
      %v772 = vpop.f32.mrb[0].mxu0
      %v773 = vpop.f32.mrb[0].mxu0
      %v774 = vadd.f32 %v674, %v773
      %v775 = vpop.f32.mrb[0].mxu0
      %776 = vmatprep.mubr.bf16.mxu0 0
      %777 = vmatmul.mubr.bf16.gmra.mrb[0].mxu0 %v720
      %v778 = vpop.f32.mrb[0].mxu0
      %v779 = vadd.f32 %v679, %v778
      %v780 = vpop.f32.mrb[0].mxu0
      %v781 = vpop.f32.mrb[0].mxu0
      %v782 = vadd.f32 %v682, %v781
      %v783 = vpop.f32.mrb[0].mxu0
      %784 = vmatprep.mubr.bf16.mxu0 0
      %785 = vmatmul.mubr.bf16.gmra.mrb[0].mxu0 %v723
      %v786 = vpop.f32.mrb[0].mxu0
      %v787 = vadd.f32 %v687, %v786
      %v788 = vpop.f32.mrb[0].mxu0
      %v789 = vpop.f32.mrb[0].mxu0
      %v790 = vadd.f32 %v690, %v789
      %v791 = vpop.f32.mrb[0].mxu0
      %792 = vdwg.mxu0
      %s793 = scalar_lea.vmem [#allocation2], 8
      %v794 = vld [vmem:[%s793] sm:$0xf]
      %v795 = vld [vmem:[%s793 + $0x8] sm:$0xf]
      %v796 = vld [vmem:[%s793 + $0x10] sm:$0xf]
      %v797 = vld [vmem:[%s793 + $0x18] sm:$0xf]
      %v798 = vld [vmem:[%s793 + $0x20] sm:$0xf]
      %v799 = vld [vmem:[%s793 + $0x28] sm:$0xf]
      %v800 = vld [vmem:[%s793 + $0x30] sm:$0xf]
      %v801 = vld [vmem:[%s793 + $0x38] sm:$0xf]
      %v802 = vld [vmem:[%s793 + $0x4] sm:$0x1]
      %v803 = vld [vmem:[%s793 + $0xc] sm:$0x1]
      %v804 = vld [vmem:[%s793 + $0x14] sm:$0x1]
      %v805 = vld [vmem:[%s793 + $0x1c] sm:$0x1]
      %v806 = vld [vmem:[%s793 + $0x24] sm:$0x1]
      %v807 = vld [vmem:[%s793 + $0x2c] sm:$0x1]
      %v808 = vld [vmem:[%s793 + $0x34] sm:$0x1]
      %v809 = vld [vmem:[%s793 + $0x3c] sm:$0x1]
      %v811 = vshrl.u32 %v794, 16
      %v813 = vrot.slane %v811, 4
      %v814 = vshll.u32 %v794, 16
      %v816 = vrot.slane %v814, 5
      %v817 = vor.u32 %v813, %v816
      %v818 = vrot.slane %v817, 4
      %v820 = vshll.u32 %v802, 16
      %v822 = vrot.slane %v820, 5
      %v823 = vsel %vm483, %v818, %v822
      %v825 = vshrl.u32 %v795, 16
      %v827 = vrot.slane %v825, 4
      %v828 = vshll.u32 %v795, 16
      %v830 = vrot.slane %v828, 5
      %v831 = vor.u32 %v827, %v830
      %v832 = vrot.slane %v831, 4
      %v834 = vshll.u32 %v803, 16
      %v836 = vrot.slane %v834, 5
      %v837 = vsel %vm483, %v832, %v836
      %v839 = vshrl.u32 %v796, 16
      %v841 = vrot.slane %v839, 4
      %v842 = vshll.u32 %v796, 16
      %v844 = vrot.slane %v842, 5
      %v845 = vor.u32 %v841, %v844
      %v846 = vrot.slane %v845, 4
      %v848 = vshll.u32 %v804, 16
      %v850 = vrot.slane %v848, 5
      %v851 = vsel %vm483, %v846, %v850
      %v853 = vshrl.u32 %v797, 16
      %v855 = vrot.slane %v853, 4
      %v856 = vshll.u32 %v797, 16
      %v858 = vrot.slane %v856, 5
      %v859 = vor.u32 %v855, %v858
      %v860 = vrot.slane %v859, 4
      %v862 = vshll.u32 %v805, 16
      %v864 = vrot.slane %v862, 5
      %v865 = vsel %vm483, %v860, %v864
      %v867 = vshrl.u32 %v798, 16
      %v869 = vrot.slane %v867, 4
      %v870 = vshll.u32 %v798, 16
      %v872 = vrot.slane %v870, 5
      %v873 = vor.u32 %v869, %v872
      %v874 = vrot.slane %v873, 4
      %v876 = vshll.u32 %v806, 16
      %v878 = vrot.slane %v876, 5
      %v879 = vsel %vm483, %v874, %v878
      %v881 = vshrl.u32 %v799, 16
      %v883 = vrot.slane %v881, 4
      %v884 = vshll.u32 %v799, 16
      %v886 = vrot.slane %v884, 5
      %v887 = vor.u32 %v883, %v886
      %v888 = vrot.slane %v887, 4
      %v890 = vshll.u32 %v807, 16
      %v892 = vrot.slane %v890, 5
      %v893 = vsel %vm483, %v888, %v892
      %v895 = vshrl.u32 %v800, 16
      %v897 = vrot.slane %v895, 4
      %v898 = vshll.u32 %v800, 16
      %v900 = vrot.slane %v898, 5
      %v901 = vor.u32 %v897, %v900
      %v902 = vrot.slane %v901, 4
      %v904 = vshll.u32 %v808, 16
      %v906 = vrot.slane %v904, 5
      %v907 = vsel %vm483, %v902, %v906
      %v909 = vshrl.u32 %v801, 16
      %v911 = vrot.slane %v909, 4
      %v912 = vshll.u32 %v801, 16
      %v914 = vrot.slane %v912, 5
      %v915 = vor.u32 %v911, %v914
      %v916 = vrot.slane %v915, 4
      %v918 = vshll.u32 %v809, 16
      %v920 = vrot.slane %v918, 5
      %v921 = vsel %vm483, %v916, %v920
      %s922 = scalar_lea.vmem %s3, 8
      %v923 = vld [vmem:[%s922] sm:$0xf]
      %s924 = scalar_lea.vmem %s3, 12
      %v925 = vld [vmem:[%s924] sm:$0xf]
      %v926 = vunpack.c.l.b16 %v823
      %v927 = vunpack.c.l.b16 %v837
      %v928 = vunpack.c.l.b16 %v851
      %v929 = vunpack.c.l.b16 %v865
      %v930 = vunpack.c.l.b16 %v879
      %v931 = vunpack.c.l.b16 %v893
      %v932 = vunpack.c.l.b16 %v907
      %v933 = vunpack.c.l.b16 %v921
      %v934 = vpack.c.b16 %v927, %v926
      %v935 = vpack.c.b16 %v929, %v928
      %v936 = vpack.c.b16 %v931, %v930
      %v937 = vpack.c.b16 %v933, %v932
      %v939 = vsel %vm611, %v934, 0
      %v942 = vsel %vm611, %v935, 0
      %v945 = vsel %vm611, %v936, 0
      %v948 = vsel %vm611, %v937, 0
      %v951 = vsel %vm624, %v925, 0
      %953 = vmatprep.subr.bf16.mxu0 0
      %954 = vmatpush1.bf16.msra.mxu0 %v951
      %955 = vmatprep.subr.bf16.mxu0 0
      %956 = vmatpush1.bf16.msra.mxu0 0
      %957 = vmatprep.subr.bf16.mxu0 0
      %958 = vmatpush1.bf16.msra.mxu0 0
      %959 = vmatprep.subr.bf16.mxu0 0
      %960 = vmatpush1.bf16.msra.mxu0 0
      %961 = vmatprep.subr.bf16.mxu0 0
      %962 = vmatpush1.bf16.msra.mxu0 0
      %963 = vmatprep.subr.bf16.mxu0 0
      %964 = vmatpush1.bf16.msra.mxu0 0
      %965 = vmatprep.subr.bf16.mxu0 0
      %966 = vmatpush1.bf16.msra.mxu0 0
      %967 = vmatprep.subr.bf16.mxu0 0
      %968 = vmatpush1.bf16.msra.mxu0 0
      %969 = vmatprep.subr.bf16.mxu0 0
      %970 = vmatpush1.bf16.msra.mxu0 0
      %971 = vmatprep.subr.bf16.mxu0 0
      %972 = vmatpush1.bf16.msra.mxu0 0
      %973 = vmatprep.subr.bf16.mxu0 0
      %974 = vmatpush1.bf16.msra.mxu0 0
      %975 = vmatprep.subr.bf16.mxu0 0
      %976 = vmatpush1.bf16.msra.mxu0 0
      %977 = vmatprep.subr.bf16.mxu0 0
      %978 = vmatpush1.bf16.msra.mxu0 0
      %979 = vmatprep.subr.bf16.mxu0 0
      %980 = vmatpush1.bf16.msra.mxu0 0
      %981 = vmatprep.subr.bf16.mxu0 0
      %982 = vmatpush1.bf16.msra.mxu0 0
      %983 = vmatprep.subr.bf16.mxu0 0
      %984 = vmatpush1.bf16.msra.mxu0 0
      %985 = vmatprep.mubr.bf16.mxu0 0
      %986 = vmatmul.mubr.bf16.gmra.mrb[0].mxu0 %v939
      %v987 = vpop.f32.mrb[0].mxu0
      %v988 = vadd.f32 0.0, %v987
      %v989 = vpop.f32.mrb[0].mxu0
      %v990 = vpop.f32.mrb[0].mxu0
      %v991 = vadd.f32 0.0, %v990
      %v992 = vpop.f32.mrb[0].mxu0
      %993 = vmatprep.mubr.bf16.mxu0 0
      %994 = vmatmul.mubr.bf16.gmra.mrb[0].mxu0 %v942
      %v995 = vpop.f32.mrb[0].mxu0
      %v996 = vadd.f32 0.0, %v995
      %v997 = vpop.f32.mrb[0].mxu0
      %v998 = vpop.f32.mrb[0].mxu0
      %v999 = vadd.f32 0.0, %v998
      %v1000 = vpop.f32.mrb[0].mxu0
      %1001 = vmatprep.mubr.bf16.mxu0 0
      %1002 = vmatmul.mubr.bf16.gmra.mrb[0].mxu0 %v945
      %v1003 = vpop.f32.mrb[0].mxu0
      %v1004 = vadd.f32 0.0, %v1003
      %v1005 = vpop.f32.mrb[0].mxu0
      %v1006 = vpop.f32.mrb[0].mxu0
      %v1007 = vadd.f32 0.0, %v1006
      %v1008 = vpop.f32.mrb[0].mxu0
      %1009 = vmatprep.mubr.bf16.mxu0 0
      %1010 = vmatmul.mubr.bf16.gmra.mrb[0].mxu0 %v948
      %v1011 = vpop.f32.mrb[0].mxu0
      %v1012 = vadd.f32 0.0, %v1011
      %v1013 = vpop.f32.mrb[0].mxu0
      %v1014 = vpop.f32.mrb[0].mxu0
      %v1015 = vadd.f32 0.0, %v1014
      %v1016 = vpop.f32.mrb[0].mxu0
      %1017 = vdwg.mxu0
      %v1026 = vunpack.c.l.b16 %v794
      %v1027 = vunpack.c.l.b16 %v795
      %v1028 = vunpack.c.l.b16 %v796
      %v1029 = vunpack.c.l.b16 %v797
      %v1030 = vunpack.c.l.b16 %v798
      %v1031 = vunpack.c.l.b16 %v799
      %v1032 = vunpack.c.l.b16 %v800
      %v1033 = vunpack.c.l.b16 %v801
      %v1034 = vpack.c.b16 %v1027, %v1026
      %v1035 = vpack.c.b16 %v1029, %v1028
      %v1036 = vpack.c.b16 %v1031, %v1030
      %v1037 = vpack.c.b16 %v1033, %v1032
      %v1039 = vsel %vm611, %v1034, 0
      %v1042 = vsel %vm611, %v1035, 0
      %v1045 = vsel %vm611, %v1036, 0
      %v1048 = vsel %vm611, %v1037, 0
      %v1051 = vsel %vm624, %v923, 0
      %1053 = vmatprep.subr.bf16.mxu0 0
      %1054 = vmatpush1.bf16.msra.mxu0 %v1051
      %1055 = vmatprep.subr.bf16.mxu0 0
      %1056 = vmatpush1.bf16.msra.mxu0 0
      %1057 = vmatprep.subr.bf16.mxu0 0
      %1058 = vmatpush1.bf16.msra.mxu0 0
      %1059 = vmatprep.subr.bf16.mxu0 0
      %1060 = vmatpush1.bf16.msra.mxu0 0
      %1061 = vmatprep.subr.bf16.mxu0 0
      %1062 = vmatpush1.bf16.msra.mxu0 0
      %1063 = vmatprep.subr.bf16.mxu0 0
      %1064 = vmatpush1.bf16.msra.mxu0 0
      %1065 = vmatprep.subr.bf16.mxu0 0
      %1066 = vmatpush1.bf16.msra.mxu0 0
      %1067 = vmatprep.subr.bf16.mxu0 0
      %1068 = vmatpush1.bf16.msra.mxu0 0
      %1069 = vmatprep.subr.bf16.mxu0 0
      %1070 = vmatpush1.bf16.msra.mxu0 0
      %1071 = vmatprep.subr.bf16.mxu0 0
      %1072 = vmatpush1.bf16.msra.mxu0 0
      %1073 = vmatprep.subr.bf16.mxu0 0
      %1074 = vmatpush1.bf16.msra.mxu0 0
      %1075 = vmatprep.subr.bf16.mxu0 0
      %1076 = vmatpush1.bf16.msra.mxu0 0
      %1077 = vmatprep.subr.bf16.mxu0 0
      %1078 = vmatpush1.bf16.msra.mxu0 0
      %1079 = vmatprep.subr.bf16.mxu0 0
      %1080 = vmatpush1.bf16.msra.mxu0 0
      %1081 = vmatprep.subr.bf16.mxu0 0
      %1082 = vmatpush1.bf16.msra.mxu0 0
      %1083 = vmatprep.subr.bf16.mxu0 0
      %1084 = vmatpush1.bf16.msra.mxu0 0
      %1085 = vmatprep.mubr.bf16.mxu0 0
      %1086 = vmatmul.mubr.bf16.gmra.mrb[0].mxu0 %v1039
      %v1087 = vpop.f32.mrb[0].mxu0
      %v1088 = vadd.f32 %v988, %v1087
      %v1089 = vpop.f32.mrb[0].mxu0
      %v1090 = vpop.f32.mrb[0].mxu0
      %v1091 = vadd.f32 %v991, %v1090
      %v1092 = vpop.f32.mrb[0].mxu0
      %1093 = vmatprep.mubr.bf16.mxu0 0
      %1094 = vmatmul.mubr.bf16.gmra.mrb[0].mxu0 %v1042
      %v1095 = vpop.f32.mrb[0].mxu0
      %v1096 = vadd.f32 %v996, %v1095
      %v1097 = vpop.f32.mrb[0].mxu0
      %v1098 = vpop.f32.mrb[0].mxu0
      %v1099 = vadd.f32 %v999, %v1098
      %v1100 = vpop.f32.mrb[0].mxu0
      %1101 = vmatprep.mubr.bf16.mxu0 0
      %1102 = vmatmul.mubr.bf16.gmra.mrb[0].mxu0 %v1045
      %v1103 = vpop.f32.mrb[0].mxu0
      %v1104 = vadd.f32 %v1004, %v1103
      %v1105 = vpop.f32.mrb[0].mxu0
      %v1106 = vpop.f32.mrb[0].mxu0
      %v1107 = vadd.f32 %v1007, %v1106
      %v1108 = vpop.f32.mrb[0].mxu0
      %1109 = vmatprep.mubr.bf16.mxu0 0
      %1110 = vmatmul.mubr.bf16.gmra.mrb[0].mxu0 %v1048
      %v1111 = vpop.f32.mrb[0].mxu0
      %v1112 = vadd.f32 %v1012, %v1111
      %v1113 = vpop.f32.mrb[0].mxu0
      %v1114 = vpop.f32.mrb[0].mxu0
      %v1115 = vadd.f32 %v1015, %v1114
      %v1116 = vpop.f32.mrb[0].mxu0
      %1117 = vdwg.mxu0
      %v1118 = vadd.f32 %v763, %v1088
      %v1119 = vadd.f32 %v766, %v1091
      %v1120 = vadd.f32 %v771, %v1096
      %v1121 = vadd.f32 %v774, %v1099
      %v1122 = vadd.f32 %v779, %v1104
      %v1123 = vadd.f32 %v782, %v1107
      %v1124 = vadd.f32 %v787, %v1112
      %v1125 = vadd.f32 %v790, %v1115
      %v1127 = vlaneseq
      %v1128 = vshrl.u32 %v1127, 7
      %v1129 = vsub.s32 0, %v1128
      %v1130 = vrot.slane %v464, %v1129
      %v1132 = vadd.f32 %v1118, %v1130
      %v1133 = vadd.f32 %v1119, %v1130
      %v1134 = vadd.f32 %v1120, %v1130
      %v1135 = vadd.f32 %v1121, %v1130
      %v1136 = vadd.f32 %v1122, %v1130
      %v1137 = vadd.f32 %v1123, %v1130
      %v1138 = vadd.f32 %v1124, %v1130
      %v1139 = vadd.f32 %v1125, %v1130
      %v1140 = vmax.f32 %v1132, 0.0
      %v1141 = vmax.f32 %v1133, 0.0
      %v1142 = vmax.f32 %v1134, 0.0
      %v1143 = vmax.f32 %v1135, 0.0
      %v1144 = vmax.f32 %v1136, 0.0
      %v1145 = vmax.f32 %v1137, 0.0
      %v1146 = vmax.f32 %v1138, 0.0
      %v1147 = vmax.f32 %v1139, 0.0
      %v1148 = vpack.c.bf16 %v1140, %v1140
      %v1149 = vpack.c.bf16 %v1141, %v1141
      %v1150 = vpack.c.bf16 %v1142, %v1142
      %v1151 = vpack.c.bf16 %v1143, %v1143
      %v1152 = vpack.c.bf16 %v1144, %v1144
      %v1153 = vpack.c.bf16 %v1145, %v1145
      %v1154 = vpack.c.bf16 %v1146, %v1146
      %v1155 = vpack.c.bf16 %v1147, %v1147
      %vm1156 = vcmask 257024
      %1157 = vst.msk [vmem:[%s395] sm:$0xf] %vm1156, %v1148
      %1158 = vst.msk [vmem:[%s395 + $0x8] sm:$0xf] %vm1156, %v1149
      %1159 = vst.msk [vmem:[%s395 + $0x10] sm:$0xf] %vm1156, %v1150
      %1160 = vst.msk [vmem:[%s395 + $0x18] sm:$0xf] %vm1156, %v1151
      %1161 = vst.msk [vmem:[%s395 + $0x20] sm:$0xf] %vm1156, %v1152
      %1162 = vst.msk [vmem:[%s395 + $0x28] sm:$0xf] %vm1156, %v1153
      %1163 = vst.msk [vmem:[%s395 + $0x30] sm:$0xf] %vm1156, %v1154
      %1164 = vst.msk [vmem:[%s395 + $0x38] sm:$0xf] %vm1156, %v1155
      %v1165 = vld [vmem:[%s793] sm:$0xf]
      %v1166 = vld [vmem:[%s793 + $0x8] sm:$0xf]
      %v1167 = vld [vmem:[%s793 + $0x10] sm:$0xf]
      %v1168 = vld [vmem:[%s793 + $0x18] sm:$0xf]
      %v1169 = vld [vmem:[%s793 + $0x20] sm:$0xf]
      %v1170 = vld [vmem:[%s793 + $0x28] sm:$0xf]
      %v1171 = vld [vmem:[%s793 + $0x30] sm:$0xf]
      %v1172 = vld [vmem:[%s793 + $0x38] sm:$0xf]
      %v1173 = vld [vmem:[%s793 + $0x4] sm:$0x1]
      %v1174 = vld [vmem:[%s793 + $0xc] sm:$0x1]
      %v1175 = vld [vmem:[%s793 + $0x14] sm:$0x1]
      %v1176 = vld [vmem:[%s793 + $0x1c] sm:$0x1]
      %v1177 = vld [vmem:[%s793 + $0x24] sm:$0x1]
      %v1178 = vld [vmem:[%s793 + $0x2c] sm:$0x1]
      %v1179 = vld [vmem:[%s793 + $0x34] sm:$0x1]
      %v1180 = vld [vmem:[%s793 + $0x3c] sm:$0x1]
      %v1182 = vshrl.u32 %v1165, 16
      %v1184 = vrot.slane %v1182, 4
      %v1185 = vshll.u32 %v1165, 16
      %v1187 = vrot.slane %v1185, 5
      %v1188 = vor.u32 %v1184, %v1187
      %v1189 = vrot.slane %v1188, 4
      %v1191 = vshll.u32 %v1173, 16
      %v1193 = vrot.slane %v1191, 5
      %v1194 = vsel %vm483, %v1189, %v1193
      %v1196 = vshrl.u32 %v1166, 16
      %v1198 = vrot.slane %v1196, 4
      %v1199 = vshll.u32 %v1166, 16
      %v1201 = vrot.slane %v1199, 5
      %v1202 = vor.u32 %v1198, %v1201
      %v1203 = vrot.slane %v1202, 4
      %v1205 = vshll.u32 %v1174, 16
      %v1207 = vrot.slane %v1205, 5
      %v1208 = vsel %vm483, %v1203, %v1207
      %v1210 = vshrl.u32 %v1167, 16
      %v1212 = vrot.slane %v1210, 4
      %v1213 = vshll.u32 %v1167, 16
      %v1215 = vrot.slane %v1213, 5
      %v1216 = vor.u32 %v1212, %v1215
      %v1217 = vrot.slane %v1216, 4
      %v1219 = vshll.u32 %v1175, 16
      %v1221 = vrot.slane %v1219, 5
      %v1222 = vsel %vm483, %v1217, %v1221
      %v1224 = vshrl.u32 %v1168, 16
      %v1226 = vrot.slane %v1224, 4
      %v1227 = vshll.u32 %v1168, 16
      %v1229 = vrot.slane %v1227, 5
      %v1230 = vor.u32 %v1226, %v1229
      %v1231 = vrot.slane %v1230, 4
      %v1233 = vshll.u32 %v1176, 16
      %v1235 = vrot.slane %v1233, 5
      %v1236 = vsel %vm483, %v1231, %v1235
      %v1238 = vshrl.u32 %v1169, 16
      %v1240 = vrot.slane %v1238, 4
      %v1241 = vshll.u32 %v1169, 16
      %v1243 = vrot.slane %v1241, 5
      %v1244 = vor.u32 %v1240, %v1243
      %v1245 = vrot.slane %v1244, 4
      %v1247 = vshll.u32 %v1177, 16
      %v1249 = vrot.slane %v1247, 5
      %v1250 = vsel %vm483, %v1245, %v1249
      %v1252 = vshrl.u32 %v1170, 16
      %v1254 = vrot.slane %v1252, 4
      %v1255 = vshll.u32 %v1170, 16
      %v1257 = vrot.slane %v1255, 5
      %v1258 = vor.u32 %v1254, %v1257
      %v1259 = vrot.slane %v1258, 4
      %v1261 = vshll.u32 %v1178, 16
      %v1263 = vrot.slane %v1261, 5
      %v1264 = vsel %vm483, %v1259, %v1263
      %v1266 = vshrl.u32 %v1171, 16
      %v1268 = vrot.slane %v1266, 4
      %v1269 = vshll.u32 %v1171, 16
      %v1271 = vrot.slane %v1269, 5
      %v1272 = vor.u32 %v1268, %v1271
      %v1273 = vrot.slane %v1272, 4
      %v1275 = vshll.u32 %v1179, 16
      %v1277 = vrot.slane %v1275, 5
      %v1278 = vsel %vm483, %v1273, %v1277
      %v1280 = vshrl.u32 %v1172, 16
      %v1282 = vrot.slane %v1280, 4
      %v1283 = vshll.u32 %v1172, 16
      %v1285 = vrot.slane %v1283, 5
      %v1286 = vor.u32 %v1282, %v1285
      %v1287 = vrot.slane %v1286, 4
      %v1289 = vshll.u32 %v1180, 16
      %v1291 = vrot.slane %v1289, 5
      %v1292 = vsel %vm483, %v1287, %v1291
      %s1293 = scalar_lea.vmem %s3, 16
      %v1294 = vld [vmem:[%s1293] sm:$0xf]
      %s1295 = scalar_lea.vmem %s3, 20
      %v1296 = vld [vmem:[%s1295] sm:$0xf]
      %v1297 = vunpack.c.l.b16 %v1194
      %v1298 = vunpack.c.l.b16 %v1208
      %v1299 = vunpack.c.l.b16 %v1222
      %v1300 = vunpack.c.l.b16 %v1236
      %v1301 = vunpack.c.l.b16 %v1250
      %v1302 = vunpack.c.l.b16 %v1264
      %v1303 = vunpack.c.l.b16 %v1278
      %v1304 = vunpack.c.l.b16 %v1292
      %v1305 = vpack.c.b16 %v1298, %v1297
      %v1306 = vpack.c.b16 %v1300, %v1299
      %v1307 = vpack.c.b16 %v1302, %v1301
      %v1308 = vpack.c.b16 %v1304, %v1303
      %v1310 = vsel %vm611, %v1305, 0
      %v1313 = vsel %vm611, %v1306, 0
      %v1316 = vsel %vm611, %v1307, 0
      %v1319 = vsel %vm611, %v1308, 0
      %v1322 = vsel %vm624, %v1296, 0
      %1324 = vmatprep.subr.bf16.mxu0 0
      %1325 = vmatpush1.bf16.msra.mxu0 %v1322
      %1326 = vmatprep.subr.bf16.mxu0 0
      %1327 = vmatpush1.bf16.msra.mxu0 0
      %1328 = vmatprep.subr.bf16.mxu0 0
      %1329 = vmatpush1.bf16.msra.mxu0 0
      %1330 = vmatprep.subr.bf16.mxu0 0
      %1331 = vmatpush1.bf16.msra.mxu0 0
      %1332 = vmatprep.subr.bf16.mxu0 0
      %1333 = vmatpush1.bf16.msra.mxu0 0
      %1334 = vmatprep.subr.bf16.mxu0 0
      %1335 = vmatpush1.bf16.msra.mxu0 0
      %1336 = vmatprep.subr.bf16.mxu0 0
      %1337 = vmatpush1.bf16.msra.mxu0 0
      %1338 = vmatprep.subr.bf16.mxu0 0
      %1339 = vmatpush1.bf16.msra.mxu0 0
      %1340 = vmatprep.subr.bf16.mxu0 0
      %1341 = vmatpush1.bf16.msra.mxu0 0
      %1342 = vmatprep.subr.bf16.mxu0 0
      %1343 = vmatpush1.bf16.msra.mxu0 0
      %1344 = vmatprep.subr.bf16.mxu0 0
      %1345 = vmatpush1.bf16.msra.mxu0 0
      %1346 = vmatprep.subr.bf16.mxu0 0
      %1347 = vmatpush1.bf16.msra.mxu0 0
      %1348 = vmatprep.subr.bf16.mxu0 0
      %1349 = vmatpush1.bf16.msra.mxu0 0
      %1350 = vmatprep.subr.bf16.mxu0 0
      %1351 = vmatpush1.bf16.msra.mxu0 0
      %1352 = vmatprep.subr.bf16.mxu0 0
      %1353 = vmatpush1.bf16.msra.mxu0 0
      %1354 = vmatprep.subr.bf16.mxu0 0
      %1355 = vmatpush1.bf16.msra.mxu0 0
      %1356 = vmatprep.mubr.bf16.mxu0 0
      %1357 = vmatmul.mubr.bf16.gmra.mrb[0].mxu0 %v1310
      %v1358 = vpop.f32.mrb[0].mxu0
      %v1359 = vadd.f32 0.0, %v1358
      %v1360 = vpop.f32.mrb[0].mxu0
      %v1361 = vpop.f32.mrb[0].mxu0
      %v1362 = vadd.f32 0.0, %v1361
      %v1363 = vpop.f32.mrb[0].mxu0
      %1364 = vmatprep.mubr.bf16.mxu0 0
      %1365 = vmatmul.mubr.bf16.gmra.mrb[0].mxu0 %v1313
      %v1366 = vpop.f32.mrb[0].mxu0
      %v1367 = vadd.f32 0.0, %v1366
      %v1368 = vpop.f32.mrb[0].mxu0
      %v1369 = vpop.f32.mrb[0].mxu0
      %v1370 = vadd.f32 0.0, %v1369
      %v1371 = vpop.f32.mrb[0].mxu0
      %1372 = vmatprep.mubr.bf16.mxu0 0
      %1373 = vmatmul.mubr.bf16.gmra.mrb[0].mxu0 %v1316
      %v1374 = vpop.f32.mrb[0].mxu0
      %v1375 = vadd.f32 0.0, %v1374
      %v1376 = vpop.f32.mrb[0].mxu0
      %v1377 = vpop.f32.mrb[0].mxu0
      %v1378 = vadd.f32 0.0, %v1377
      %v1379 = vpop.f32.mrb[0].mxu0
      %1380 = vmatprep.mubr.bf16.mxu0 0
      %1381 = vmatmul.mubr.bf16.gmra.mrb[0].mxu0 %v1319
      %v1382 = vpop.f32.mrb[0].mxu0
      %v1383 = vadd.f32 0.0, %v1382
      %v1384 = vpop.f32.mrb[0].mxu0
      %v1385 = vpop.f32.mrb[0].mxu0
      %v1386 = vadd.f32 0.0, %v1385
      %v1387 = vpop.f32.mrb[0].mxu0
      %1388 = vdwg.mxu0
      %v1397 = vunpack.c.l.b16 %v1165
      %v1398 = vunpack.c.l.b16 %v1166
      %v1399 = vunpack.c.l.b16 %v1167
      %v1400 = vunpack.c.l.b16 %v1168
      %v1401 = vunpack.c.l.b16 %v1169
      %v1402 = vunpack.c.l.b16 %v1170
      %v1403 = vunpack.c.l.b16 %v1171
      %v1404 = vunpack.c.l.b16 %v1172
      %v1405 = vpack.c.b16 %v1398, %v1397
      %v1406 = vpack.c.b16 %v1400, %v1399
      %v1407 = vpack.c.b16 %v1402, %v1401
      %v1408 = vpack.c.b16 %v1404, %v1403
      %v1410 = vsel %vm611, %v1405, 0
      %v1413 = vsel %vm611, %v1406, 0
      %v1416 = vsel %vm611, %v1407, 0
      %v1419 = vsel %vm611, %v1408, 0
      %v1422 = vsel %vm624, %v1294, 0
      %1424 = vmatprep.subr.bf16.mxu0 0
      %1425 = vmatpush1.bf16.msra.mxu0 %v1422
      %1426 = vmatprep.subr.bf16.mxu0 0
      %1427 = vmatpush1.bf16.msra.mxu0 0
      %1428 = vmatprep.subr.bf16.mxu0 0
      %1429 = vmatpush1.bf16.msra.mxu0 0
      %1430 = vmatprep.subr.bf16.mxu0 0
      %1431 = vmatpush1.bf16.msra.mxu0 0
      %1432 = vmatprep.subr.bf16.mxu0 0
      %1433 = vmatpush1.bf16.msra.mxu0 0
      %1434 = vmatprep.subr.bf16.mxu0 0
      %1435 = vmatpush1.bf16.msra.mxu0 0
      %1436 = vmatprep.subr.bf16.mxu0 0
      %1437 = vmatpush1.bf16.msra.mxu0 0
      %1438 = vmatprep.subr.bf16.mxu0 0
      %1439 = vmatpush1.bf16.msra.mxu0 0
      %1440 = vmatprep.subr.bf16.mxu0 0
      %1441 = vmatpush1.bf16.msra.mxu0 0
      %1442 = vmatprep.subr.bf16.mxu0 0
      %1443 = vmatpush1.bf16.msra.mxu0 0
      %1444 = vmatprep.subr.bf16.mxu0 0
      %1445 = vmatpush1.bf16.msra.mxu0 0
      %1446 = vmatprep.subr.bf16.mxu0 0
      %1447 = vmatpush1.bf16.msra.mxu0 0
      %1448 = vmatprep.subr.bf16.mxu0 0
      %1449 = vmatpush1.bf16.msra.mxu0 0
      %1450 = vmatprep.subr.bf16.mxu0 0
      %1451 = vmatpush1.bf16.msra.mxu0 0
      %1452 = vmatprep.subr.bf16.mxu0 0
      %1453 = vmatpush1.bf16.msra.mxu0 0
      %1454 = vmatprep.subr.bf16.mxu0 0
      %1455 = vmatpush1.bf16.msra.mxu0 0
      %1456 = vmatprep.mubr.bf16.mxu0 0
      %1457 = vmatmul.mubr.bf16.gmra.mrb[0].mxu0 %v1410
      %v1458 = vpop.f32.mrb[0].mxu0
      %v1459 = vadd.f32 %v1359, %v1458
      %v1460 = vpop.f32.mrb[0].mxu0
      %v1461 = vpop.f32.mrb[0].mxu0
      %v1462 = vadd.f32 %v1362, %v1461
      %v1463 = vpop.f32.mrb[0].mxu0
      %1464 = vmatprep.mubr.bf16.mxu0 0
      %1465 = vmatmul.mubr.bf16.gmra.mrb[0].mxu0 %v1413
      %v1466 = vpop.f32.mrb[0].mxu0
      %v1467 = vadd.f32 %v1367, %v1466
      %v1468 = vpop.f32.mrb[0].mxu0
      %v1469 = vpop.f32.mrb[0].mxu0
      %v1470 = vadd.f32 %v1370, %v1469
      %v1471 = vpop.f32.mrb[0].mxu0
      %1472 = vmatprep.mubr.bf16.mxu0 0
      %1473 = vmatmul.mubr.bf16.gmra.mrb[0].mxu0 %v1416
      %v1474 = vpop.f32.mrb[0].mxu0
      %v1475 = vadd.f32 %v1375, %v1474
      %v1476 = vpop.f32.mrb[0].mxu0
      %v1477 = vpop.f32.mrb[0].mxu0
      %v1478 = vadd.f32 %v1378, %v1477
      %v1479 = vpop.f32.mrb[0].mxu0
      %1480 = vmatprep.mubr.bf16.mxu0 0
      %1481 = vmatmul.mubr.bf16.gmra.mrb[0].mxu0 %v1419
      %v1482 = vpop.f32.mrb[0].mxu0
      %v1483 = vadd.f32 %v1383, %v1482
      %v1484 = vpop.f32.mrb[0].mxu0
      %v1485 = vpop.f32.mrb[0].mxu0
      %v1486 = vadd.f32 %v1386, %v1485
      %v1487 = vpop.f32.mrb[0].mxu0
      %1488 = vdwg.mxu0
      %s1489 = scalar_lea.vmem [#allocation2], 16
      %v1490 = vld [vmem:[%s1489] sm:$0xf]
      %v1491 = vld [vmem:[%s1489 + $0x8] sm:$0xf]
      %v1492 = vld [vmem:[%s1489 + $0x10] sm:$0xf]
      %v1493 = vld [vmem:[%s1489 + $0x18] sm:$0xf]
      %v1494 = vld [vmem:[%s1489 + $0x20] sm:$0xf]
      %v1495 = vld [vmem:[%s1489 + $0x28] sm:$0xf]
      %v1496 = vld [vmem:[%s1489 + $0x30] sm:$0xf]
      %v1497 = vld [vmem:[%s1489 + $0x38] sm:$0xf]
      %v1498 = vld [vmem:[%s1489 + $0x4] sm:$0x1]
      %v1499 = vld [vmem:[%s1489 + $0xc] sm:$0x1]
      %v1500 = vld [vmem:[%s1489 + $0x14] sm:$0x1]
      %v1501 = vld [vmem:[%s1489 + $0x1c] sm:$0x1]
      %v1502 = vld [vmem:[%s1489 + $0x24] sm:$0x1]
      %v1503 = vld [vmem:[%s1489 + $0x2c] sm:$0x1]
      %v1504 = vld [vmem:[%s1489 + $0x34] sm:$0x1]
      %v1505 = vld [vmem:[%s1489 + $0x3c] sm:$0x1]
      %v1507 = vshrl.u32 %v1490, 16
      %v1509 = vrot.slane %v1507, 4
      %v1510 = vshll.u32 %v1490, 16
      %v1512 = vrot.slane %v1510, 5
      %v1513 = vor.u32 %v1509, %v1512
      %v1514 = vrot.slane %v1513, 4
      %v1516 = vshll.u32 %v1498, 16
      %v1518 = vrot.slane %v1516, 5
      %v1519 = vsel %vm483, %v1514, %v1518
      %v1521 = vshrl.u32 %v1491, 16
      %v1523 = vrot.slane %v1521, 4
      %v1524 = vshll.u32 %v1491, 16
      %v1526 = vrot.slane %v1524, 5
      %v1527 = vor.u32 %v1523, %v1526
      %v1528 = vrot.slane %v1527, 4
      %v1530 = vshll.u32 %v1499, 16
      %v1532 = vrot.slane %v1530, 5
      %v1533 = vsel %vm483, %v1528, %v1532
      %v1535 = vshrl.u32 %v1492, 16
      %v1537 = vrot.slane %v1535, 4
      %v1538 = vshll.u32 %v1492, 16
      %v1540 = vrot.slane %v1538, 5
      %v1541 = vor.u32 %v1537, %v1540
      %v1542 = vrot.slane %v1541, 4
      %v1544 = vshll.u32 %v1500, 16
      %v1546 = vrot.slane %v1544, 5
      %v1547 = vsel %vm483, %v1542, %v1546
      %v1549 = vshrl.u32 %v1493, 16
      %v1551 = vrot.slane %v1549, 4
      %v1552 = vshll.u32 %v1493, 16
      %v1554 = vrot.slane %v1552, 5
      %v1555 = vor.u32 %v1551, %v1554
      %v1556 = vrot.slane %v1555, 4
      %v1558 = vshll.u32 %v1501, 16
      %v1560 = vrot.slane %v1558, 5
      %v1561 = vsel %vm483, %v1556, %v1560
      %v1563 = vshrl.u32 %v1494, 16
      %v1565 = vrot.slane %v1563, 4
      %v1566 = vshll.u32 %v1494, 16
      %v1568 = vrot.slane %v1566, 5
      %v1569 = vor.u32 %v1565, %v1568
      %v1570 = vrot.slane %v1569, 4
      %v1572 = vshll.u32 %v1502, 16
      %v1574 = vrot.slane %v1572, 5
      %v1575 = vsel %vm483, %v1570, %v1574
      %v1577 = vshrl.u32 %v1495, 16
      %v1579 = vrot.slane %v1577, 4
      %v1580 = vshll.u32 %v1495, 16
      %v1582 = vrot.slane %v1580, 5
      %v1583 = vor.u32 %v1579, %v1582
      %v1584 = vrot.slane %v1583, 4
      %v1586 = vshll.u32 %v1503, 16
      %v1588 = vrot.slane %v1586, 5
      %v1589 = vsel %vm483, %v1584, %v1588
      %v1591 = vshrl.u32 %v1496, 16
      %v1593 = vrot.slane %v1591, 4
      %v1594 = vshll.u32 %v1496, 16
      %v1596 = vrot.slane %v1594, 5
      %v1597 = vor.u32 %v1593, %v1596
      %v1598 = vrot.slane %v1597, 4
      %v1600 = vshll.u32 %v1504, 16
      %v1602 = vrot.slane %v1600, 5
      %v1603 = vsel %vm483, %v1598, %v1602
      %v1605 = vshrl.u32 %v1497, 16
      %v1607 = vrot.slane %v1605, 4
      %v1608 = vshll.u32 %v1497, 16
      %v1610 = vrot.slane %v1608, 5
      %v1611 = vor.u32 %v1607, %v1610
      %v1612 = vrot.slane %v1611, 4
      %v1614 = vshll.u32 %v1505, 16
      %v1616 = vrot.slane %v1614, 5
      %v1617 = vsel %vm483, %v1612, %v1616
      %s1618 = scalar_lea.vmem %s3, 24
      %v1619 = vld [vmem:[%s1618] sm:$0xf]
      %s1620 = scalar_lea.vmem %s3, 28
      %v1621 = vld [vmem:[%s1620] sm:$0xf]
      %v1622 = vunpack.c.l.b16 %v1519
      %v1623 = vunpack.c.l.b16 %v1533
      %v1624 = vunpack.c.l.b16 %v1547
      %v1625 = vunpack.c.l.b16 %v1561
      %v1626 = vunpack.c.l.b16 %v1575
      %v1627 = vunpack.c.l.b16 %v1589
      %v1628 = vunpack.c.l.b16 %v1603
      %v1629 = vunpack.c.l.b16 %v1617
      %v1630 = vpack.c.b16 %v1623, %v1622
      %v1631 = vpack.c.b16 %v1625, %v1624
      %v1632 = vpack.c.b16 %v1627, %v1626
      %v1633 = vpack.c.b16 %v1629, %v1628
      %v1635 = vsel %vm611, %v1630, 0
      %v1638 = vsel %vm611, %v1631, 0
      %v1641 = vsel %vm611, %v1632, 0
      %v1644 = vsel %vm611, %v1633, 0
      %v1647 = vsel %vm624, %v1621, 0
      %1649 = vmatprep.subr.bf16.mxu0 0
      %1650 = vmatpush1.bf16.msra.mxu0 %v1647
      %1651 = vmatprep.subr.bf16.mxu0 0
      %1652 = vmatpush1.bf16.msra.mxu0 0
      %1653 = vmatprep.subr.bf16.mxu0 0
      %1654 = vmatpush1.bf16.msra.mxu0 0
      %1655 = vmatprep.subr.bf16.mxu0 0
      %1656 = vmatpush1.bf16.msra.mxu0 0
      %1657 = vmatprep.subr.bf16.mxu0 0
      %1658 = vmatpush1.bf16.msra.mxu0 0
      %1659 = vmatprep.subr.bf16.mxu0 0
      %1660 = vmatpush1.bf16.msra.mxu0 0
      %1661 = vmatprep.subr.bf16.mxu0 0
      %1662 = vmatpush1.bf16.msra.mxu0 0
      %1663 = vmatprep.subr.bf16.mxu0 0
      %1664 = vmatpush1.bf16.msra.mxu0 0
      %1665 = vmatprep.subr.bf16.mxu0 0
      %1666 = vmatpush1.bf16.msra.mxu0 0
      %1667 = vmatprep.subr.bf16.mxu0 0
      %1668 = vmatpush1.bf16.msra.mxu0 0
      %1669 = vmatprep.subr.bf16.mxu0 0
      %1670 = vmatpush1.bf16.msra.mxu0 0
      %1671 = vmatprep.subr.bf16.mxu0 0
      %1672 = vmatpush1.bf16.msra.mxu0 0
      %1673 = vmatprep.subr.bf16.mxu0 0
      %1674 = vmatpush1.bf16.msra.mxu0 0
      %1675 = vmatprep.subr.bf16.mxu0 0
      %1676 = vmatpush1.bf16.msra.mxu0 0
      %1677 = vmatprep.subr.bf16.mxu0 0
      %1678 = vmatpush1.bf16.msra.mxu0 0
      %1679 = vmatprep.subr.bf16.mxu0 0
      %1680 = vmatpush1.bf16.msra.mxu0 0
      %1681 = vmatprep.mubr.bf16.mxu0 0
      %1682 = vmatmul.mubr.bf16.gmra.mrb[0].mxu0 %v1635
      %v1683 = vpop.f32.mrb[0].mxu0
      %v1684 = vadd.f32 0.0, %v1683
      %v1685 = vpop.f32.mrb[0].mxu0
      %v1686 = vpop.f32.mrb[0].mxu0
      %v1687 = vadd.f32 0.0, %v1686
      %v1688 = vpop.f32.mrb[0].mxu0
      %1689 = vmatprep.mubr.bf16.mxu0 0
      %1690 = vmatmul.mubr.bf16.gmra.mrb[0].mxu0 %v1638
      %v1691 = vpop.f32.mrb[0].mxu0
      %v1692 = vadd.f32 0.0, %v1691
      %v1693 = vpop.f32.mrb[0].mxu0
      %v1694 = vpop.f32.mrb[0].mxu0
      %v1695 = vadd.f32 0.0, %v1694
      %v1696 = vpop.f32.mrb[0].mxu0
      %1697 = vmatprep.mubr.bf16.mxu0 0
      %1698 = vmatmul.mubr.bf16.gmra.mrb[0].mxu0 %v1641
      %v1699 = vpop.f32.mrb[0].mxu0
      %v1700 = vadd.f32 0.0, %v1699
      %v1701 = vpop.f32.mrb[0].mxu0
      %v1702 = vpop.f32.mrb[0].mxu0
      %v1703 = vadd.f32 0.0, %v1702
      %v1704 = vpop.f32.mrb[0].mxu0
      %1705 = vmatprep.mubr.bf16.mxu0 0
      %1706 = vmatmul.mubr.bf16.gmra.mrb[0].mxu0 %v1644
      %v1707 = vpop.f32.mrb[0].mxu0
      %v1708 = vadd.f32 0.0, %v1707
      %v1709 = vpop.f32.mrb[0].mxu0
      %v1710 = vpop.f32.mrb[0].mxu0
      %v1711 = vadd.f32 0.0, %v1710
      %v1712 = vpop.f32.mrb[0].mxu0
      %1713 = vdwg.mxu0
      %v1722 = vunpack.c.l.b16 %v1490
      %v1723 = vunpack.c.l.b16 %v1491
      %v1724 = vunpack.c.l.b16 %v1492
      %v1725 = vunpack.c.l.b16 %v1493
      %v1726 = vunpack.c.l.b16 %v1494
      %v1727 = vunpack.c.l.b16 %v1495
      %v1728 = vunpack.c.l.b16 %v1496
      %v1729 = vunpack.c.l.b16 %v1497
      %v1730 = vpack.c.b16 %v1723, %v1722
      %v1731 = vpack.c.b16 %v1725, %v1724
      %v1732 = vpack.c.b16 %v1727, %v1726
      %v1733 = vpack.c.b16 %v1729, %v1728
      %v1735 = vsel %vm611, %v1730, 0
      %v1738 = vsel %vm611, %v1731, 0
      %v1741 = vsel %vm611, %v1732, 0
      %v1744 = vsel %vm611, %v1733, 0
      %v1747 = vsel %vm624, %v1619, 0
      %1749 = vmatprep.subr.bf16.mxu0 0
      %1750 = vmatpush1.bf16.msra.mxu0 %v1747
      %1751 = vmatprep.subr.bf16.mxu0 0
      %1752 = vmatpush1.bf16.msra.mxu0 0
      %1753 = vmatprep.subr.bf16.mxu0 0
      %1754 = vmatpush1.bf16.msra.mxu0 0
      %1755 = vmatprep.subr.bf16.mxu0 0
      %1756 = vmatpush1.bf16.msra.mxu0 0
      %1757 = vmatprep.subr.bf16.mxu0 0
      %1758 = vmatpush1.bf16.msra.mxu0 0
      %1759 = vmatprep.subr.bf16.mxu0 0
      %1760 = vmatpush1.bf16.msra.mxu0 0
      %1761 = vmatprep.subr.bf16.mxu0 0
      %1762 = vmatpush1.bf16.msra.mxu0 0
      %1763 = vmatprep.subr.bf16.mxu0 0
      %1764 = vmatpush1.bf16.msra.mxu0 0
      %1765 = vmatprep.subr.bf16.mxu0 0
      %1766 = vmatpush1.bf16.msra.mxu0 0
      %1767 = vmatprep.subr.bf16.mxu0 0
      %1768 = vmatpush1.bf16.msra.mxu0 0
      %1769 = vmatprep.subr.bf16.mxu0 0
      %1770 = vmatpush1.bf16.msra.mxu0 0
      %1771 = vmatprep.subr.bf16.mxu0 0
      %1772 = vmatpush1.bf16.msra.mxu0 0
      %1773 = vmatprep.subr.bf16.mxu0 0
      %1774 = vmatpush1.bf16.msra.mxu0 0
      %1775 = vmatprep.subr.bf16.mxu0 0
      %1776 = vmatpush1.bf16.msra.mxu0 0
      %1777 = vmatprep.subr.bf16.mxu0 0
      %1778 = vmatpush1.bf16.msra.mxu0 0
      %1779 = vmatprep.subr.bf16.mxu0 0
      %1780 = vmatpush1.bf16.msra.mxu0 0
      %1781 = vmatprep.mubr.bf16.mxu0 0
      %1782 = vmatmul.mubr.bf16.gmra.mrb[0].mxu0 %v1735
      %v1783 = vpop.f32.mrb[0].mxu0
      %v1784 = vadd.f32 %v1684, %v1783
      %v1785 = vpop.f32.mrb[0].mxu0
      %v1786 = vpop.f32.mrb[0].mxu0
      %v1787 = vadd.f32 %v1687, %v1786
      %v1788 = vpop.f32.mrb[0].mxu0
      %1789 = vmatprep.mubr.bf16.mxu0 0
      %1790 = vmatmul.mubr.bf16.gmra.mrb[0].mxu0 %v1738
      %v1791 = vpop.f32.mrb[0].mxu0
      %v1792 = vadd.f32 %v1692, %v1791
      %v1793 = vpop.f32.mrb[0].mxu0
      %v1794 = vpop.f32.mrb[0].mxu0
      %v1795 = vadd.f32 %v1695, %v1794
      %v1796 = vpop.f32.mrb[0].mxu0
      %1797 = vmatprep.mubr.bf16.mxu0 0
      %1798 = vmatmul.mubr.bf16.gmra.mrb[0].mxu0 %v1741
      %v1799 = vpop.f32.mrb[0].mxu0
      %v1800 = vadd.f32 %v1700, %v1799
      %v1801 = vpop.f32.mrb[0].mxu0
      %v1802 = vpop.f32.mrb[0].mxu0
      %v1803 = vadd.f32 %v1703, %v1802
      %v1804 = vpop.f32.mrb[0].mxu0
      %1805 = vmatprep.mubr.bf16.mxu0 0
      %1806 = vmatmul.mubr.bf16.gmra.mrb[0].mxu0 %v1744
      %v1807 = vpop.f32.mrb[0].mxu0
      %v1808 = vadd.f32 %v1708, %v1807
      %v1809 = vpop.f32.mrb[0].mxu0
      %v1810 = vpop.f32.mrb[0].mxu0
      %v1811 = vadd.f32 %v1711, %v1810
      %v1812 = vpop.f32.mrb[0].mxu0
      %1813 = vdwg.mxu0
      %v1814 = vadd.f32 %v1459, %v1784
      %v1815 = vadd.f32 %v1462, %v1787
      %v1816 = vadd.f32 %v1467, %v1792
      %v1817 = vadd.f32 %v1470, %v1795
      %v1818 = vadd.f32 %v1475, %v1800
      %v1819 = vadd.f32 %v1478, %v1803
      %v1820 = vadd.f32 %v1483, %v1808
      %v1821 = vadd.f32 %v1486, %v1811
      %v1822 = vadd.f32 %v1814, %v1130
      %v1823 = vadd.f32 %v1815, %v1130
      %v1824 = vadd.f32 %v1816, %v1130
      %v1825 = vadd.f32 %v1817, %v1130
      %v1826 = vadd.f32 %v1818, %v1130
      %v1827 = vadd.f32 %v1819, %v1130
      %v1828 = vadd.f32 %v1820, %v1130
      %v1829 = vadd.f32 %v1821, %v1130
      %v1830 = vmax.f32 %v1822, 0.0
      %v1831 = vmax.f32 %v1823, 0.0
      %v1832 = vmax.f32 %v1824, 0.0
      %v1833 = vmax.f32 %v1825, 0.0
      %v1834 = vmax.f32 %v1826, 0.0
      %v1835 = vmax.f32 %v1827, 0.0
      %v1836 = vmax.f32 %v1828, 0.0
      %v1837 = vmax.f32 %v1829, 0.0
      %v1838 = vpack.c.bf16 %v1830, %v1830
      %v1839 = vpack.c.bf16 %v1831, %v1831
      %v1840 = vpack.c.bf16 %v1832, %v1832
      %v1841 = vpack.c.bf16 %v1833, %v1833
      %v1842 = vpack.c.bf16 %v1834, %v1834
      %v1843 = vpack.c.bf16 %v1835, %v1835
      %v1844 = vpack.c.bf16 %v1836, %v1836
      %v1845 = vpack.c.bf16 %v1837, %v1837
      %s1846 = scalar_lea.vmem %s395, 4
      %1847 = vst.msk [vmem:[%s1846] sm:$0xf] %vm1156, %v1838
      %1848 = vst.msk [vmem:[%s1846 + $0x8] sm:$0xf] %vm1156, %v1839
      %1849 = vst.msk [vmem:[%s1846 + $0x10] sm:$0xf] %vm1156, %v1840
      %1850 = vst.msk [vmem:[%s1846 + $0x18] sm:$0xf] %vm1156, %v1841
      %1851 = vst.msk [vmem:[%s1846 + $0x20] sm:$0xf] %vm1156, %v1842
      %1852 = vst.msk [vmem:[%s1846 + $0x28] sm:$0xf] %vm1156, %v1843
      %1853 = vst.msk [vmem:[%s1846 + $0x30] sm:$0xf] %vm1156, %v1844
      %1854 = vst.msk [vmem:[%s1846 + $0x38] sm:$0xf] %vm1156, %v1845
      %s1855 = smul.u32 8, %s21
      %p1856 = scmp.lt.s32.totalorder %s20, 1
      %s1857 = scalar_select %p1856, %s20, 1
      %p1858 = scmp.lt.s32.totalorder %s1855, 15
      %s1859 = scalar_select %p1858, %s1855, 15
      %s1860 = smul.addr %s1859, 2
      %s1861 = smul.addr %s1857, 32
      %s1862 = sadd.s32 %s1860, %s1861
      %s1863 = smul.addr %s1862, 4
      %s1864 = scalar_lea.vmem %s5, %s1863
      // Predicated region
      $region41: #{up_conv_forward.1} parent=39 // pred_check
        %p1865 = pneg %p184
      $region42: #{up_conv_forward.1} parent=39 // pred_check_branch
        %1867 = sbr.rel (%p1865) target = $region44
      $region43: #{up_conv_forward.1} parent=39 // pred_region
        %s1868 = smul.u32 8, %s21
      $region44: #{up_conv_forward.1} parent=39 // pred_fallthru
        _
    $region40: #{up_conv_forward.1} parent=5 // pred_fallthru
      _
    %p1869 = scmp.le.s32.totalorder 2, %s11
    // Predicated region
    $region45: #{up_conv_forward.1} parent=5 // pred_check
      %p1870 = pneg %p1869
    $region46: #{up_conv_forward.1} parent=5 // pred_check_branch
      %1872 = sbr.rel (%p1870) target = $region48
    $region47: #{up_conv_forward.1} parent=5 // pred_region
      %s1873 = ssub.s32 %s11, 2
      // Predicated region
      $region49: #{up_conv_forward.1} parent=47 // pred_check
        %p1874 = pneg %p190
      $region50: #{up_conv_forward.1} parent=47 // pred_check_branch
        %1876 = sbr.rel (%p1874) target = $region52
      $region51: #{up_conv_forward.1} parent=47 // pred_region
        %s1877 = smul.u32 8, %s23
        %p1878 = scmp.lt.s32.totalorder %s22, 1
        %s1879 = scalar_select %p1878, %s22, 1
        %p1880 = scmp.lt.s32.totalorder %s1877, 15
        %s1881 = scalar_select %p1880, %s1877, 15
        %s1882 = smul.addr %s1881, 2
        %s1883 = smul.addr %s1879, 32
        %s1884 = sadd.s32 %s1882, %s1883
        %s1885 = smul.addr %s1884, 4
        %s1886 = scalar_lea.vmem %s5, %s1885
      $region52: #{up_conv_forward.1} parent=47 // pred_fallthru
        _
    $region48: #{up_conv_forward.1} parent=5 // pred_fallthru
      _
  $region6: #{up_conv_forward.1} parent=0 // loop_footer
    %s15 = sadd.s32 1, %s11
  $region7: #{up_conv_forward.1} parent=0 // loop_footer_branch
    %10 = sbr.rel target = $region3
  $region8: #{up_conv_forward.1} parent=0 // loop_exit
    _

</llo_original>
